<compile_context>
chip_gen: v6e
topology: v6e:2x2x1
jax: 0.10.0
libtpu: 0.0.40
codegen_flags: <defaults>
</compile_context>

<pallas_src>
import jax
import jax.numpy as jnp
from jax.experimental import pallas as pl
from jax.experimental.pallas import tpu as pltpu

# ---------------------------------------------------------------------------
# Model definition (matches the PyTorch Autoencoder with input_shape=(28, 28))
# ---------------------------------------------------------------------------
IN_FEATURES = 784
OUT_FEATURES = 784
LANE = 128

LAYER_DIMS = [
    (784, 128), (128, 64), (64, 32), (32, 16), (16, 8),   # encoder
    (8, 32), (32, 64), (64, 128), (128, 784),             # decoder
]
ACTS = ["relu", "relu", "relu", "relu", "none",           # encoder
        "relu", "relu", "relu", "tanh"]                   # decoder
NUM_LAYERS = len(LAYER_DIMS)


def _round_up(x, m):
    return ((x + m - 1) // m) * m


# Kernel-internal layer dims: HBM-facing feature dims (784 in / 784 out) stay
# UNPADDED so x / out DMAs move exactly the delivered bytes; hidden dims (which
# only live in VMEM) are padded to 128 lanes for lane-dense tiles.
PADDED_DIMS = []
for _idx, (_fi, _fo) in enumerate(LAYER_DIMS):
    _pi = _fi if _idx == 0 else _round_up(_fi, LANE)
    _po = _fo if _idx == NUM_LAYERS - 1 else _round_up(_fo, LANE)
    PADDED_DIMS.append((_pi, _po))


# ---------------------------------------------------------------------------
# Kernel
# ---------------------------------------------------------------------------
def autoencoder_kernel(x_ref, *refs):
    """One batch tile of the full forward pass.

    refs = (w0, b0, w1, b1, ..., w8, b8, out_ref).
    Weights may be bf16; MXU accumulation is always f32; activations are
    applied in f32 (v5e-safe) and downcast only before the next matmul.
    The final layer stays f32 and is written straight to the f32 output ref.
    """
    out_ref = refs[-1]
    params = refs[:-1]
    compute_dtype = params[0].dtype  # dtype of the weights / activations

    h = x_ref[...]  # (TILE_B, 784) in compute dtype
    for i in range(NUM_LAYERS):
        w = params[2 * i][...]                      # (in_pad, out_pad)
        b = params[2 * i + 1][...]                  # (1, out_pad), f32
        y = jnp.dot(h, w, preferred_element_type=jnp.float32) + b
        if ACTS[i] == "relu":
            y = jnp.maximum(y, 0.0)
        elif ACTS[i] == "tanh":
            y = jnp.tanh(y)
        # Downcast between layers (no-op for f32); keep the last layer in f32.
        h = y.astype(compute_dtype) if i < NUM_LAYERS - 1 else y

    out_ref[...] = h.astype(out_ref.dtype)          # f32 (TILE_B, 784)


# ---------------------------------------------------------------------------
# Host-side helpers
# ---------------------------------------------------------------------------
def pad_params(weights, biases, dtype):
    """Zero-pad hidden dims to lane-dense shapes; cast weights to `dtype`."""
    pw, pb = [], []
    for (w, b), (pi, po) in zip(zip(weights, biases), PADDED_DIMS):
        fi, fo = w.shape
        if (fi, fo) == (pi, po):
            wp = w.astype(dtype)
        else:
            wp = jnp.zeros((pi, po), dtype).at[:fi, :fo].set(w.astype(dtype))
        b2 = b.reshape(1, -1).astype(jnp.float32)
        if fo == po:
            bp = b2
        else:
            bp = jnp.zeros((1, po), jnp.float32).at[:, :fo].set(b2)
        pw.append(wp)
        pb.append(bp)
    return pw, pb


def _choose_tile(batch, tile_b):
    """Pick a batch tile (multiple of 8) and the padded batch size."""
    b_round = _round_up(batch, 8)
    tile = max(8, min(tile_b, b_round))
    tile = _round_up(tile, 8)
    # On large batches make sure the parallel grid has >= 2 tiles so both
    # v7x TensorCores (and their DMA engines) are fed.
    if tile >= b_round and b_round >= 256:
        tile = _round_up((b_round + 1) // 2, 8)
    b_pad = _round_up(batch, tile)
    return tile, b_pad


def _cost_estimate(b_pad, dtype):
    itemsize = jnp.dtype(dtype).itemsize
    flops = 2 * b_pad * sum(fi * fo for fi, fo in LAYER_DIMS)
    transcendentals = b_pad * OUT_FEATURES                      # final tanh
    param_bytes = sum(pi * po * itemsize + po * 4 for pi, po in PADDED_DIMS)
    bytes_accessed = (b_pad * IN_FEATURES * itemsize            # x read
                      + b_pad * OUT_FEATURES * 4                # f32 out write
                      + param_bytes)
    return pl.CostEstimate(flops=flops, transcendentals=transcendentals,
                           bytes_accessed=bytes_accessed)


def autoencoder_forward(x, weights, biases, *, tile_b=512, dtype=jnp.float32):
    """Full autoencoder forward.  x: (B, 784) f32.  Returns (B, 784) f32."""
    B, F = x.shape
    assert F == IN_FEATURES

    tile, b_pad = _choose_tile(B, tile_b)
    num_tiles = b_pad // tile

    # Input in compute dtype; only materialize a padded copy if actually needed.
    x_c = x.astype(dtype)
    if b_pad != B:
        x_c = jnp.zeros((b_pad, IN_FEATURES), dtype).at[:B].set(x_c)

    pw, pb = pad_params(weights, biases, dtype)
    args = [x_c]
    for w, b in zip(pw, pb):
        args.append(w)
        args.append(b)

    # x / out tiled over the batch grid; params resident (constant block index,
    # single-buffered so they don't burn double-buffer VMEM).
    x_spec = pl.BlockSpec((tile, IN_FEATURES), lambda i: (i, 0))
    out_spec = pl.BlockSpec((tile, OUT_FEATURES), lambda i: (i, 0))
    param_specs = []
    for (pi, po) in PADDED_DIMS:
        param_specs.append(pl.BlockSpec((pi, po), lambda i: (0, 0),
                                        pipeline_mode=pl.Buffered(1)))   # weight
        param_specs.append(pl.BlockSpec((1, po), lambda i: (0, 0),
                                        pipeline_mode=pl.Buffered(1)))   # bias

    out = pl.pallas_call(
        autoencoder_kernel,
        out_shape=jax.ShapeDtypeStruct((b_pad, OUT_FEATURES), jnp.float32),
        grid=(num_tiles,),
        in_specs=[x_spec] + param_specs,
        out_specs=out_spec,
        compiler_params=pltpu.CompilerParams(
            dimension_semantics=("parallel",),     # shards batch across TCs on v7x
            vmem_limit_bytes=32 * 1024 * 1024,     # fits v5e/v6e/v7x at tile<=1024
        ),
        cost_estimate=_cost_estimate(b_pad, dtype),
    )(*args)

    return out if b_pad == B else out[:B]


# ---------------------------------------------------------------------------
# Parameter init + pure-JAX reference
# ---------------------------------------------------------------------------
def init_params(key):
    """PyTorch-like uniform(-1/sqrt(fan_in), 1/sqrt(fan_in)) init (f32)."""
    weights, biases = [], []
    for (fan_in, fan_out) in LAYER_DIMS:
        key, kw, kb = jax.random.split(key, 3)
        bound = 1.0 / jnp.sqrt(float(fan_in))
        w = jax.random.uniform(kw, (fan_in, fan_out), jnp.float32, -bound, bound)
        b = jax.random.uniform(kb, (1, fan_out), jnp.float32, -bound, bound)
        weights.append(w)
        biases.append(b)
    return weights, biases


def reference_forward(x, weights, biases):
    h = x
    for i, (w, b) in enumerate(zip(weights, biases)):
        h = h @ w + b
        if ACTS[i] == "relu":
            h = jnp.maximum(h, 0.0)
        elif ACTS[i] == "tanh":
            h = jnp.tanh(h)
    return h


# ---------------------------------------------------------------------------
if __name__ == "__main__":
    key = jax.random.PRNGKey(0)
    key, kx = jax.random.split(key)

    B = 8
    x = jax.random.normal(kx, (B, IN_FEATURES), dtype=jnp.float32)
    weights, biases = init_params(key)

    ref = reference_forward(x, weights, biases)

    # f32 path (single tile): must match the reference tightly.
    out_f32 = jax.block_until_ready(
        autoencoder_forward(x, weights, biases, dtype=jnp.float32))
    assert out_f32.shape == (B, OUT_FEATURES)
    assert out_f32.dtype == jnp.float32
    assert jnp.allclose(out_f32, ref, atol=1e-5, rtol=1e-5)

    # Multi-tile path (batch padding + grid iteration) at small shapes.
    key, kx2 = jax.random.split(key)
    B2 = 40
    x2 = jax.random.normal(kx2, (B2, IN_FEATURES), dtype=jnp.float32)
    ref2 = reference_forward(x2, weights, biases)
    out2 = jax.block_until_ready(
        autoencoder_forward(x2, weights, biases, tile_b=16, dtype=jnp.float32))
    assert out2.shape == (B2, OUT_FEATURES)
    assert jnp.allclose(out2, ref2, atol=1e-5, rtol=1e-5)

    # bf16 weights/activations with f32 accumulation and f32 output
    # (production / large-batch path): runs and stays close to the reference.
    out_bf16 = jax.block_until_ready(
        autoencoder_forward(x, weights, biases, dtype=jnp.bfloat16))
    assert out_bf16.shape == (B, OUT_FEATURES)
    assert out_bf16.dtype == jnp.float32
    assert float(jnp.max(jnp.abs(out_bf16 - ref))) < 0.1

    print("KERNEL_OK")
</pallas_src>

<mosaic_0001>
module attributes {stable_mosaic.version = 11 : i64} {
  func.func @autoencoder_kernel(%arg0: i32, %arg1: memref<8x784xf32, #tpu.memory_space<vmem>>, %arg2: memref<784x128xf32, #tpu.memory_space<vmem>>, %arg3: memref<1x128xf32, #tpu.memory_space<vmem>>, %arg4: memref<128x128xf32, #tpu.memory_space<vmem>>, %arg5: memref<1x128xf32, #tpu.memory_space<vmem>>, %arg6: memref<128x128xf32, #tpu.memory_space<vmem>>, %arg7: memref<1x128xf32, #tpu.memory_space<vmem>>, %arg8: memref<128x128xf32, #tpu.memory_space<vmem>>, %arg9: memref<1x128xf32, #tpu.memory_space<vmem>>, %arg10: memref<128x128xf32, #tpu.memory_space<vmem>>, %arg11: memref<1x128xf32, #tpu.memory_space<vmem>>, %arg12: memref<128x128xf32, #tpu.memory_space<vmem>>, %arg13: memref<1x128xf32, #tpu.memory_space<vmem>>, %arg14: memref<128x128xf32, #tpu.memory_space<vmem>>, %arg15: memref<1x128xf32, #tpu.memory_space<vmem>>, %arg16: memref<128x128xf32, #tpu.memory_space<vmem>>, %arg17: memref<1x128xf32, #tpu.memory_space<vmem>>, %arg18: memref<128x784xf32, #tpu.memory_space<vmem>>, %arg19: memref<1x784xf32, #tpu.memory_space<vmem>>, %arg20: memref<8x784xf32, #tpu.memory_space<vmem>>) attributes {dimension_semantics = [#tpu.dimension_semantics<parallel>], iteration_bounds = array<i64: 1>, scalar_prefetch = 0 : i64, scratch_operands = 0 : i64, tpu.core_type = #tpu.core_type<tc>, window_params = [{transform_indices = @transform_0, window_bounds = array<i64: 8, 784>}, {pipeline_mode = #tpu.pipeline_mode<synchronous>, transform_indices = @transform_1, window_bounds = array<i64: 784, 128>}, {pipeline_mode = #tpu.pipeline_mode<synchronous>, transform_indices = @transform_2, window_bounds = array<i64: 1, 128>}, {pipeline_mode = #tpu.pipeline_mode<synchronous>, transform_indices = @transform_3, window_bounds = array<i64: 128, 128>}, {pipeline_mode = #tpu.pipeline_mode<synchronous>, transform_indices = @transform_4, window_bounds = array<i64: 1, 128>}, {pipeline_mode = #tpu.pipeline_mode<synchronous>, transform_indices = @transform_5, window_bounds = array<i64: 128, 128>}, {pipeline_mode = #tpu.pipeline_mode<synchronous>, transform_indices = @transform_6, window_bounds = array<i64: 1, 128>}, {pipeline_mode = #tpu.pipeline_mode<synchronous>, transform_indices = @transform_7, window_bounds = array<i64: 128, 128>}, {pipeline_mode = #tpu.pipeline_mode<synchronous>, transform_indices = @transform_8, window_bounds = array<i64: 1, 128>}, {pipeline_mode = #tpu.pipeline_mode<synchronous>, transform_indices = @transform_9, window_bounds = array<i64: 128, 128>}, {pipeline_mode = #tpu.pipeline_mode<synchronous>, transform_indices = @transform_10, window_bounds = array<i64: 1, 128>}, {pipeline_mode = #tpu.pipeline_mode<synchronous>, transform_indices = @transform_11, window_bounds = array<i64: 128, 128>}, {pipeline_mode = #tpu.pipeline_mode<synchronous>, transform_indices = @transform_12, window_bounds = array<i64: 1, 128>}, {pipeline_mode = #tpu.pipeline_mode<synchronous>, transform_indices = @transform_13, window_bounds = array<i64: 128, 128>}, {pipeline_mode = #tpu.pipeline_mode<synchronous>, transform_indices = @transform_14, window_bounds = array<i64: 1, 128>}, {pipeline_mode = #tpu.pipeline_mode<synchronous>, transform_indices = @transform_15, window_bounds = array<i64: 128, 128>}, {pipeline_mode = #tpu.pipeline_mode<synchronous>, transform_indices = @transform_16, window_bounds = array<i64: 1, 128>}, {pipeline_mode = #tpu.pipeline_mode<synchronous>, transform_indices = @transform_17, window_bounds = array<i64: 128, 784>}, {pipeline_mode = #tpu.pipeline_mode<synchronous>, transform_indices = @transform_18, window_bounds = array<i64: 1, 784>}, {transform_indices = @transform_19, window_bounds = array<i64: 8, 784>}]} {
    %c0 = arith.constant 0 : index
    %c0_0 = arith.constant 0 : index
    %0 = vector.load %arg1[%c0, %c0_0] : memref<8x784xf32, #tpu.memory_space<vmem>>, vector<8x784xf32>
    %c0_1 = arith.constant 0 : index
    %c0_2 = arith.constant 0 : index
    %1 = vector.load %arg2[%c0_1, %c0_2] : memref<784x128xf32, #tpu.memory_space<vmem>>, vector<784x128xf32>
    %c0_3 = arith.constant 0 : index
    %c0_4 = arith.constant 0 : index
    %2 = vector.load %arg3[%c0_3, %c0_4] : memref<1x128xf32, #tpu.memory_space<vmem>>, vector<1x128xf32>
    %cst = arith.constant dense<0.000000e+00> : vector<8x128xf32>
    %3 = tpu.matmul %0, %1, %cst {dimension_numbers = #tpu.dot_dimension_numbers<[1], [0], [0], [1], [0, 0, 1, 1], [], []>} : vector<8x784xf32>, vector<784x128xf32>, vector<8x128xf32> -> vector<8x128xf32>
    %4 = vector.broadcast %2 : vector<1x128xf32> to vector<8x128xf32>
    %5 = arith.addf %3, %4 : vector<8x128xf32>
    %cst_5 = arith.constant 0.000000e+00 : f32
    %6 = vector.broadcast %cst_5 : f32 to vector<8x128xf32>
    %7 = arith.maximumf %5, %6 : vector<8x128xf32>
    %c0_6 = arith.constant 0 : index
    %c0_7 = arith.constant 0 : index
    %8 = vector.load %arg4[%c0_6, %c0_7] : memref<128x128xf32, #tpu.memory_space<vmem>>, vector<128x128xf32>
    %c0_8 = arith.constant 0 : index
    %c0_9 = arith.constant 0 : index
    %9 = vector.load %arg5[%c0_8, %c0_9] : memref<1x128xf32, #tpu.memory_space<vmem>>, vector<1x128xf32>
    %cst_10 = arith.constant dense<0.000000e+00> : vector<8x128xf32>
    %10 = tpu.matmul %7, %8, %cst_10 {dimension_numbers = #tpu.dot_dimension_numbers<[1], [0], [0], [1], [0, 0, 1, 1], [], []>} : vector<8x128xf32>, vector<128x128xf32>, vector<8x128xf32> -> vector<8x128xf32>
    %11 = vector.broadcast %9 : vector<1x128xf32> to vector<8x128xf32>
    %12 = arith.addf %10, %11 : vector<8x128xf32>
    %cst_11 = arith.constant 0.000000e+00 : f32
    %13 = vector.broadcast %cst_11 : f32 to vector<8x128xf32>
    %14 = arith.maximumf %12, %13 : vector<8x128xf32>
    %c0_12 = arith.constant 0 : index
    %c0_13 = arith.constant 0 : index
    %15 = vector.load %arg6[%c0_12, %c0_13] : memref<128x128xf32, #tpu.memory_space<vmem>>, vector<128x128xf32>
    %c0_14 = arith.constant 0 : index
    %c0_15 = arith.constant 0 : index
    %16 = vector.load %arg7[%c0_14, %c0_15] : memref<1x128xf32, #tpu.memory_space<vmem>>, vector<1x128xf32>
    %cst_16 = arith.constant dense<0.000000e+00> : vector<8x128xf32>
    %17 = tpu.matmul %14, %15, %cst_16 {dimension_numbers = #tpu.dot_dimension_numbers<[1], [0], [0], [1], [0, 0, 1, 1], [], []>} : vector<8x128xf32>, vector<128x128xf32>, vector<8x128xf32> -> vector<8x128xf32>
    %18 = vector.broadcast %16 : vector<1x128xf32> to vector<8x128xf32>
    %19 = arith.addf %17, %18 : vector<8x128xf32>
    %cst_17 = arith.constant 0.000000e+00 : f32
    %20 = vector.broadcast %cst_17 : f32 to vector<8x128xf32>
    %21 = arith.maximumf %19, %20 : vector<8x128xf32>
    %c0_18 = arith.constant 0 : index
    %c0_19 = arith.constant 0 : index
    %22 = vector.load %arg8[%c0_18, %c0_19] : memref<128x128xf32, #tpu.memory_space<vmem>>, vector<128x128xf32>
    %c0_20 = arith.constant 0 : index
    %c0_21 = arith.constant 0 : index
    %23 = vector.load %arg9[%c0_20, %c0_21] : memref<1x128xf32, #tpu.memory_space<vmem>>, vector<1x128xf32>
    %cst_22 = arith.constant dense<0.000000e+00> : vector<8x128xf32>
    %24 = tpu.matmul %21, %22, %cst_22 {dimension_numbers = #tpu.dot_dimension_numbers<[1], [0], [0], [1], [0, 0, 1, 1], [], []>} : vector<8x128xf32>, vector<128x128xf32>, vector<8x128xf32> -> vector<8x128xf32>
    %25 = vector.broadcast %23 : vector<1x128xf32> to vector<8x128xf32>
    %26 = arith.addf %24, %25 : vector<8x128xf32>
    %cst_23 = arith.constant 0.000000e+00 : f32
    %27 = vector.broadcast %cst_23 : f32 to vector<8x128xf32>
    %28 = arith.maximumf %26, %27 : vector<8x128xf32>
    %c0_24 = arith.constant 0 : index
    %c0_25 = arith.constant 0 : index
    %29 = vector.load %arg10[%c0_24, %c0_25] : memref<128x128xf32, #tpu.memory_space<vmem>>, vector<128x128xf32>
    %c0_26 = arith.constant 0 : index
    %c0_27 = arith.constant 0 : index
    %30 = vector.load %arg11[%c0_26, %c0_27] : memref<1x128xf32, #tpu.memory_space<vmem>>, vector<1x128xf32>
    %cst_28 = arith.constant dense<0.000000e+00> : vector<8x128xf32>
    %31 = tpu.matmul %28, %29, %cst_28 {dimension_numbers = #tpu.dot_dimension_numbers<[1], [0], [0], [1], [0, 0, 1, 1], [], []>} : vector<8x128xf32>, vector<128x128xf32>, vector<8x128xf32> -> vector<8x128xf32>
    %32 = vector.broadcast %30 : vector<1x128xf32> to vector<8x128xf32>
    %33 = arith.addf %31, %32 : vector<8x128xf32>
    %c0_29 = arith.constant 0 : index
    %c0_30 = arith.constant 0 : index
    %34 = vector.load %arg12[%c0_29, %c0_30] : memref<128x128xf32, #tpu.memory_space<vmem>>, vector<128x128xf32>
    %c0_31 = arith.constant 0 : index
    %c0_32 = arith.constant 0 : index
    %35 = vector.load %arg13[%c0_31, %c0_32] : memref<1x128xf32, #tpu.memory_space<vmem>>, vector<1x128xf32>
    %cst_33 = arith.constant dense<0.000000e+00> : vector<8x128xf32>
    %36 = tpu.matmul %33, %34, %cst_33 {dimension_numbers = #tpu.dot_dimension_numbers<[1], [0], [0], [1], [0, 0, 1, 1], [], []>} : vector<8x128xf32>, vector<128x128xf32>, vector<8x128xf32> -> vector<8x128xf32>
    %37 = vector.broadcast %35 : vector<1x128xf32> to vector<8x128xf32>
    %38 = arith.addf %36, %37 : vector<8x128xf32>
    %cst_34 = arith.constant 0.000000e+00 : f32
    %39 = vector.broadcast %cst_34 : f32 to vector<8x128xf32>
    %40 = arith.maximumf %38, %39 : vector<8x128xf32>
    %c0_35 = arith.constant 0 : index
    %c0_36 = arith.constant 0 : index
    %41 = vector.load %arg14[%c0_35, %c0_36] : memref<128x128xf32, #tpu.memory_space<vmem>>, vector<128x128xf32>
    %c0_37 = arith.constant 0 : index
    %c0_38 = arith.constant 0 : index
    %42 = vector.load %arg15[%c0_37, %c0_38] : memref<1x128xf32, #tpu.memory_space<vmem>>, vector<1x128xf32>
    %cst_39 = arith.constant dense<0.000000e+00> : vector<8x128xf32>
    %43 = tpu.matmul %40, %41, %cst_39 {dimension_numbers = #tpu.dot_dimension_numbers<[1], [0], [0], [1], [0, 0, 1, 1], [], []>} : vector<8x128xf32>, vector<128x128xf32>, vector<8x128xf32> -> vector<8x128xf32>
    %44 = vector.broadcast %42 : vector<1x128xf32> to vector<8x128xf32>
    %45 = arith.addf %43, %44 : vector<8x128xf32>
    %cst_40 = arith.constant 0.000000e+00 : f32
    %46 = vector.broadcast %cst_40 : f32 to vector<8x128xf32>
    %47 = arith.maximumf %45, %46 : vector<8x128xf32>
    %c0_41 = arith.constant 0 : index
    %c0_42 = arith.constant 0 : index
    %48 = vector.load %arg16[%c0_41, %c0_42] : memref<128x128xf32, #tpu.memory_space<vmem>>, vector<128x128xf32>
    %c0_43 = arith.constant 0 : index
    %c0_44 = arith.constant 0 : index
    %49 = vector.load %arg17[%c0_43, %c0_44] : memref<1x128xf32, #tpu.memory_space<vmem>>, vector<1x128xf32>
    %cst_45 = arith.constant dense<0.000000e+00> : vector<8x128xf32>
    %50 = tpu.matmul %47, %48, %cst_45 {dimension_numbers = #tpu.dot_dimension_numbers<[1], [0], [0], [1], [0, 0, 1, 1], [], []>} : vector<8x128xf32>, vector<128x128xf32>, vector<8x128xf32> -> vector<8x128xf32>
    %51 = vector.broadcast %49 : vector<1x128xf32> to vector<8x128xf32>
    %52 = arith.addf %50, %51 : vector<8x128xf32>
    %cst_46 = arith.constant 0.000000e+00 : f32
    %53 = vector.broadcast %cst_46 : f32 to vector<8x128xf32>
    %54 = arith.maximumf %52, %53 : vector<8x128xf32>
    %c0_47 = arith.constant 0 : index
    %c0_48 = arith.constant 0 : index
    %55 = vector.load %arg18[%c0_47, %c0_48] : memref<128x784xf32, #tpu.memory_space<vmem>>, vector<128x784xf32>
    %c0_49 = arith.constant 0 : index
    %c0_50 = arith.constant 0 : index
    %56 = vector.load %arg19[%c0_49, %c0_50] : memref<1x784xf32, #tpu.memory_space<vmem>>, vector<1x784xf32>
    %cst_51 = arith.constant dense<0.000000e+00> : vector<8x784xf32>
    %57 = tpu.matmul %54, %55, %cst_51 {dimension_numbers = #tpu.dot_dimension_numbers<[1], [0], [0], [1], [0, 0, 1, 1], [], []>} : vector<8x128xf32>, vector<128x784xf32>, vector<8x784xf32> -> vector<8x784xf32>
    %58 = vector.broadcast %56 : vector<1x784xf32> to vector<8x784xf32>
    %59 = arith.addf %57, %58 : vector<8x784xf32>
    %60 = math.tanh %59 : vector<8x784xf32>
    %c0_52 = arith.constant 0 : index
    %c0_53 = arith.constant 0 : index
    %61 = vector.load %arg20[%c0_52, %c0_53] : memref<8x784xf32, #tpu.memory_space<vmem>>, vector<8x784xf32>
    tpu.vector_store %arg20[%c0_52, %c0_53], %60 {strides = array<i32>} : memref<8x784xf32, #tpu.memory_space<vmem>>, vector<8x784xf32>,
    return
  }
  func.func @transform_0(%arg0: i32) -> (i32, i32) {
    %c0_i32 = arith.constant 0 : i32
    %c0_i32_0 = arith.constant 0 : i32
    return %arg0, %c0_i32 : i32, i32
  }
  func.func @transform_1(%arg0: i32) -> (i32, i32) {
    %c0_i32 = arith.constant 0 : i32
    %c0_i32_0 = arith.constant 0 : i32
    %c0_i32_1 = arith.constant 0 : i32
    return %c0_i32, %c0_i32_0 : i32, i32
  }
  func.func @transform_2(%arg0: i32) -> (i32, i32) {
    %c0_i32 = arith.constant 0 : i32
    %c0_i32_0 = arith.constant 0 : i32
    %c0_i32_1 = arith.constant 0 : i32
    return %c0_i32, %c0_i32_0 : i32, i32
  }
  func.func @transform_3(%arg0: i32) -> (i32, i32) {
    %c0_i32 = arith.constant 0 : i32
    %c0_i32_0 = arith.constant 0 : i32
    %c0_i32_1 = arith.constant 0 : i32
    return %c0_i32, %c0_i32_0 : i32, i32
  }
  func.func @transform_4(%arg0: i32) -> (i32, i32) {
    %c0_i32 = arith.constant 0 : i32
    %c0_i32_0 = arith.constant 0 : i32
    %c0_i32_1 = arith.constant 0 : i32
    return %c0_i32, %c0_i32_0 : i32, i32
  }
  func.func @transform_5(%arg0: i32) -> (i32, i32) {
    %c0_i32 = arith.constant 0 : i32
    %c0_i32_0 = arith.constant 0 : i32
    %c0_i32_1 = arith.constant 0 : i32
    return %c0_i32, %c0_i32_0 : i32, i32
  }
  func.func @transform_6(%arg0: i32) -> (i32, i32) {
    %c0_i32 = arith.constant 0 : i32
    %c0_i32_0 = arith.constant 0 : i32
    %c0_i32_1 = arith.constant 0 : i32
    return %c0_i32, %c0_i32_0 : i32, i32
  }
  func.func @transform_7(%arg0: i32) -> (i32, i32) {
    %c0_i32 = arith.constant 0 : i32
    %c0_i32_0 = arith.constant 0 : i32
    %c0_i32_1 = arith.constant 0 : i32
    return %c0_i32, %c0_i32_0 : i32, i32
  }
  func.func @transform_8(%arg0: i32) -> (i32, i32) {
    %c0_i32 = arith.constant 0 : i32
    %c0_i32_0 = arith.constant 0 : i32
    %c0_i32_1 = arith.constant 0 : i32
    return %c0_i32, %c0_i32_0 : i32, i32
  }
  func.func @transform_9(%arg0: i32) -> (i32, i32) {
    %c0_i32 = arith.constant 0 : i32
    %c0_i32_0 = arith.constant 0 : i32
    %c0_i32_1 = arith.constant 0 : i32
    return %c0_i32, %c0_i32_0 : i32, i32
  }
  func.func @transform_10(%arg0: i32) -> (i32, i32) {
    %c0_i32 = arith.constant 0 : i32
    %c0_i32_0 = arith.constant 0 : i32
    %c0_i32_1 = arith.constant 0 : i32
    return %c0_i32, %c0_i32_0 : i32, i32
  }
  func.func @transform_11(%arg0: i32) -> (i32, i32) {
    %c0_i32 = arith.constant 0 : i32
    %c0_i32_0 = arith.constant 0 : i32
    %c0_i32_1 = arith.constant 0 : i32
    return %c0_i32, %c0_i32_0 : i32, i32
  }
  func.func @transform_12(%arg0: i32) -> (i32, i32) {
    %c0_i32 = arith.constant 0 : i32
    %c0_i32_0 = arith.constant 0 : i32
    %c0_i32_1 = arith.constant 0 : i32
    return %c0_i32, %c0_i32_0 : i32, i32
  }
  func.func @transform_13(%arg0: i32) -> (i32, i32) {
    %c0_i32 = arith.constant 0 : i32
    %c0_i32_0 = arith.constant 0 : i32
    %c0_i32_1 = arith.constant 0 : i32
    return %c0_i32, %c0_i32_0 : i32, i32
  }
  func.func @transform_14(%arg0: i32) -> (i32, i32) {
    %c0_i32 = arith.constant 0 : i32
    %c0_i32_0 = arith.constant 0 : i32
    %c0_i32_1 = arith.constant 0 : i32
    return %c0_i32, %c0_i32_0 : i32, i32
  }
  func.func @transform_15(%arg0: i32) -> (i32, i32) {
    %c0_i32 = arith.constant 0 : i32
    %c0_i32_0 = arith.constant 0 : i32
    %c0_i32_1 = arith.constant 0 : i32
    return %c0_i32, %c0_i32_0 : i32, i32
  }
  func.func @transform_16(%arg0: i32) -> (i32, i32) {
    %c0_i32 = arith.constant 0 : i32
    %c0_i32_0 = arith.constant 0 : i32
    %c0_i32_1 = arith.constant 0 : i32
    return %c0_i32, %c0_i32_0 : i32, i32
  }
  func.func @transform_17(%arg0: i32) -> (i32, i32) {
    %c0_i32 = arith.constant 0 : i32
    %c0_i32_0 = arith.constant 0 : i32
    %c0_i32_1 = arith.constant 0 : i32
    return %c0_i32, %c0_i32_0 : i32, i32
  }
  func.func @transform_18(%arg0: i32) -> (i32, i32) {
    %c0_i32 = arith.constant 0 : i32
    %c0_i32_0 = arith.constant 0 : i32
    %c0_i32_1 = arith.constant 0 : i32
    return %c0_i32, %c0_i32_0 : i32, i32
  }
  func.func @transform_19(%arg0: i32) -> (i32, i32) {
    %c0_i32 = arith.constant 0 : i32
    %c0_i32_0 = arith.constant 0 : i32
    return %arg0, %c0_i32 : i32, i32
  }
}

</mosaic_0001>

<llo_original>
// kernel: tpu_custom_call.1
$region0: #{tpu_custom_call.1}
  #allocation0 [shape = 'u32[]', space=smem, size = 0x4, offset = 0x4, fixed_abs, tag = 'smem constant byte address 0x4 - core index']
  #allocation1 [shape = 'u32[144,128]{1,0:T(1,128)}', space=vmem, size = 0x12000, scoped, tag = 'internal scratch']
  %s0 = inlined_call_operand.hbm [shape: f32[8,784], index: 0, kind: input, shape index: {}]
  %s1 = inlined_call_operand.vmem [shape: f32[784,128], index: 1, kind: input, shape index: {}]
  %s2 = inlined_call_operand.hbm [shape: f32[1,128], index: 2, kind: input, shape index: {}]
  %s3 = inlined_call_operand.vmem [shape: f32[128,128], index: 3, kind: input, shape index: {}]
  %s4 = inlined_call_operand.hbm [shape: f32[1,128], index: 4, kind: input, shape index: {}]
  %s5 = inlined_call_operand.vmem [shape: f32[128,128], index: 5, kind: input, shape index: {}]
  %s6 = inlined_call_operand.hbm [shape: f32[1,128], index: 6, kind: input, shape index: {}]
  %s7 = inlined_call_operand.vmem [shape: f32[128,128], index: 7, kind: input, shape index: {}]
  %s8 = inlined_call_operand.hbm [shape: f32[1,128], index: 8, kind: input, shape index: {}]
  %s9 = inlined_call_operand.vmem [shape: f32[128,128], index: 9, kind: input, shape index: {}]
  %s10 = inlined_call_operand.vmem [shape: f32[1,128], index: 10, kind: input, shape index: {}]
  %s11 = inlined_call_operand.vmem [shape: f32[128,128], index: 11, kind: input, shape index: {}]
  %s12 = inlined_call_operand.vmem [shape: f32[1,128], index: 12, kind: input, shape index: {}]
  %s13 = inlined_call_operand.vmem [shape: f32[128,128], index: 13, kind: input, shape index: {}]
  %s14 = inlined_call_operand.vmem [shape: f32[1,128], index: 14, kind: input, shape index: {}]
  %s15 = inlined_call_operand.vmem [shape: f32[128,128], index: 15, kind: input, shape index: {}]
  %s16 = inlined_call_operand.vmem [shape: f32[1,128], index: 16, kind: input, shape index: {}]
  %s17 = inlined_call_operand.vmem [shape: f32[128,784], index: 17, kind: input, shape index: {}]
  %s18 = inlined_call_operand.vmem [shape: f32[1,784], index: 18, kind: input, shape index: {}]
  %s19 = inlined_call_operand.hbm [shape: f32[8,784], index: 19, kind: output, shape index: {}]
  %s20 = sld [smem:[#allocation0]]
  $region106: #{tpu_custom_call.1} parent=0
    _
  %s22 = ssub.s32 1, %s20
  %s23 = scalar_select 0, %s22, %s20
  $region1: #{tpu_custom_call.1} parent=0
    #allocation2 [shape = 'u8[28672]{0}', space=vmem, size = 0x7000, scoped, tag = 'input window, operand 0, single buffered']
    #allocation3 [shape = 's32[1]{0}', space=sflag, size = 0x4, scoped, tag = 'scoped memory for tpu_custom_call.1']
    #allocation4 [shape = 's32[1]{0}', space=sflag, size = 0x4, scoped, tag = 'scoped memory for tpu_custom_call.1']
    #allocation5 [shape = 'u8[512]{0}', space=vmem, size = 0x400, scoped, tag = 'input window, operand 2, single buffered']
    #allocation6 [shape = 's32[1]{0}', space=sflag, size = 0x4, scoped, tag = 'scoped memory for tpu_custom_call.1']
    #allocation7 [shape = 'u8[512]{0}', space=vmem, size = 0x400, scoped, tag = 'input window, operand 4, single buffered']
    #allocation8 [shape = 'u8[512]{0}', space=vmem, size = 0x400, scoped, tag = 'input window, operand 6, single buffered']
    #allocation9 [shape = 's32[1]{0}', space=sflag, size = 0x4, scoped, tag = 'scoped memory for tpu_custom_call.1']
    #allocation10 [shape = 'u8[512]{0}', space=vmem, size = 0x400, scoped, tag = 'input window, operand 8, single buffered']
    #allocation11 [shape = 'u8[28672]{0}', space=vmem, size = 0x7000, scoped, tag = 'output window, operand 0, single buffered']
    %24 = vsyncpa [#allocation3], 0
    %25 = vsyncpa [#allocation6], 0
    %26 = vsyncpa [#allocation9], 0
    %27 = vsyncpa [#allocation4], 0
    // Predicated region
    $region2: #{tpu_custom_call.1} parent=1 // pred_check
      _
    $region3: #{tpu_custom_call.1} parent=1 // pred_check_branch
      %29 = sbr.rel (0) target = $region5
    $region4: #{tpu_custom_call.1} parent=1 // pred_region
      %s31 = ssub.s32 896, 896
      %32 = vsyncadd [#allocation3], %s31
      %s34 = sshll.u32 [#allocation2], 4
      %s35 = int_to_ptr.vmem [resolvable:$true] %s34
      %37 = dma.hbm_to_vmem [thread:$0]  %s0, 896, %s35, [#allocation3]
    $region5: #{tpu_custom_call.1} parent=1 // pred_fallthru
      _
    // Predicated region
    $region6: #{tpu_custom_call.1} parent=1 // pred_check
      _
    $region7: #{tpu_custom_call.1} parent=1 // pred_check_branch
      %39 = sbr.rel (0) target = $region9
    $region8: #{tpu_custom_call.1} parent=1 // pred_region
      _
    $region9: #{tpu_custom_call.1} parent=1 // pred_fallthru
      _
    // Predicated region
    $region10: #{tpu_custom_call.1} parent=1 // pred_check
      _
    $region11: #{tpu_custom_call.1} parent=1 // pred_check_branch
      %41 = sbr.rel (0) target = $region13
    $region12: #{tpu_custom_call.1} parent=1 // pred_region
      %s43 = ssub.s32 16, 16
      %44 = vsyncadd [#allocation6], %s43
      %s46 = sshll.u32 [#allocation5], 4
      %s47 = int_to_ptr.vmem [resolvable:$true] %s46
      %49 = dma.hbm_to_vmem [thread:$0]  %s2, 16, %s47, [#allocation6]
    $region13: #{tpu_custom_call.1} parent=1 // pred_fallthru
      _
    // Predicated region
    $region14: #{tpu_custom_call.1} parent=1 // pred_check
      _
    $region15: #{tpu_custom_call.1} parent=1 // pred_check_branch
      %51 = sbr.rel (0) target = $region17
    $region16: #{tpu_custom_call.1} parent=1 // pred_region
      _
    $region17: #{tpu_custom_call.1} parent=1 // pred_fallthru
      _
    // Predicated region
    $region18: #{tpu_custom_call.1} parent=1 // pred_check
      _
    $region19: #{tpu_custom_call.1} parent=1 // pred_check_branch
      %53 = sbr.rel (0) target = $region21
    $region20: #{tpu_custom_call.1} parent=1 // pred_region
      %s55 = ssub.s32 16, 16
      %56 = vsyncadd [#allocation6], %s55
      %s58 = sshll.u32 [#allocation7], 4
      %s59 = int_to_ptr.vmem [resolvable:$true] %s58
      %61 = dma.hbm_to_vmem [thread:$0]  %s4, 16, %s59, [#allocation6]
    $region21: #{tpu_custom_call.1} parent=1 // pred_fallthru
      _
    // Predicated region
    $region22: #{tpu_custom_call.1} parent=1 // pred_check
      _
    $region23: #{tpu_custom_call.1} parent=1 // pred_check_branch
      %63 = sbr.rel (0) target = $region25
    $region24: #{tpu_custom_call.1} parent=1 // pred_region
      _
    $region25: #{tpu_custom_call.1} parent=1 // pred_fallthru
      _
    // Predicated region
    $region26: #{tpu_custom_call.1} parent=1 // pred_check
      _
    $region27: #{tpu_custom_call.1} parent=1 // pred_check_branch
      %65 = sbr.rel (0) target = $region29
    $region28: #{tpu_custom_call.1} parent=1 // pred_region
      %s67 = ssub.s32 16, 16
      %68 = vsyncadd [#allocation9], %s67
      %s70 = sshll.u32 [#allocation8], 4
      %s71 = int_to_ptr.vmem [resolvable:$true] %s70
      %73 = dma.hbm_to_vmem [thread:$0]  %s6, 16, %s71, [#allocation9]
    $region29: #{tpu_custom_call.1} parent=1 // pred_fallthru
      _
    // Predicated region
    $region30: #{tpu_custom_call.1} parent=1 // pred_check
      _
    $region31: #{tpu_custom_call.1} parent=1 // pred_check_branch
      %75 = sbr.rel (0) target = $region33
    $region32: #{tpu_custom_call.1} parent=1 // pred_region
      _
    $region33: #{tpu_custom_call.1} parent=1 // pred_fallthru
      _
    // Predicated region
    $region34: #{tpu_custom_call.1} parent=1 // pred_check
      _
    $region35: #{tpu_custom_call.1} parent=1 // pred_check_branch
      %77 = sbr.rel (0) target = $region37
    $region36: #{tpu_custom_call.1} parent=1 // pred_region
      %s79 = ssub.s32 16, 16
      %80 = vsyncadd [#allocation9], %s79
      %s82 = sshll.u32 [#allocation10], 4
      %s83 = int_to_ptr.vmem [resolvable:$true] %s82
      %85 = dma.hbm_to_vmem [thread:$0]  %s8, 16, %s83, [#allocation9]
    $region37: #{tpu_custom_call.1} parent=1 // pred_fallthru
      _
    // Predicated region
    $region38: #{tpu_custom_call.1} parent=1 // pred_check
      _
    $region39: #{tpu_custom_call.1} parent=1 // pred_check_branch
      %87 = sbr.rel (0) target = $region41
    $region40: #{tpu_custom_call.1} parent=1 // pred_region
      _
    $region41: #{tpu_custom_call.1} parent=1 // pred_fallthru
      _
    // Predicated region
    $region42: #{tpu_custom_call.1} parent=1 // pred_check
      _
    $region43: #{tpu_custom_call.1} parent=1 // pred_check_branch
      %89 = sbr.rel (0) target = $region45
    $region44: #{tpu_custom_call.1} parent=1 // pred_region
      _
    $region45: #{tpu_custom_call.1} parent=1 // pred_fallthru
      _
    // Predicated region
    $region46: #{tpu_custom_call.1} parent=1 // pred_check
      _
    $region47: #{tpu_custom_call.1} parent=1 // pred_check_branch
      %91 = sbr.rel (0) target = $region49
    $region48: #{tpu_custom_call.1} parent=1 // pred_region
      _
    $region49: #{tpu_custom_call.1} parent=1 // pred_fallthru
      _
    // Predicated region
    $region50: #{tpu_custom_call.1} parent=1 // pred_check
      _
    $region51: #{tpu_custom_call.1} parent=1 // pred_check_branch
      %93 = sbr.rel (0) target = $region53
    $region52: #{tpu_custom_call.1} parent=1 // pred_region
      _
    $region53: #{tpu_custom_call.1} parent=1 // pred_fallthru
      _
    // Predicated region
    $region54: #{tpu_custom_call.1} parent=1 // pred_check
      _
    $region55: #{tpu_custom_call.1} parent=1 // pred_check_branch
      %95 = sbr.rel (0) target = $region57
    $region56: #{tpu_custom_call.1} parent=1 // pred_region
      _
    $region57: #{tpu_custom_call.1} parent=1 // pred_fallthru
      _
    // Predicated region
    $region58: #{tpu_custom_call.1} parent=1 // pred_check
      _
    $region59: #{tpu_custom_call.1} parent=1 // pred_check_branch
      %97 = sbr.rel (0) target = $region61
    $region60: #{tpu_custom_call.1} parent=1 // pred_region
      _
    $region61: #{tpu_custom_call.1} parent=1 // pred_fallthru
      _
    // Predicated region
    $region62: #{tpu_custom_call.1} parent=1 // pred_check
      _
    $region63: #{tpu_custom_call.1} parent=1 // pred_check_branch
      %99 = sbr.rel (0) target = $region65
    $region64: #{tpu_custom_call.1} parent=1 // pred_region
      _
    $region65: #{tpu_custom_call.1} parent=1 // pred_fallthru
      _
    // Predicated region
    $region66: #{tpu_custom_call.1} parent=1 // pred_check
      _
    $region67: #{tpu_custom_call.1} parent=1 // pred_check_branch
      %101 = sbr.rel (0) target = $region69
    $region68: #{tpu_custom_call.1} parent=1 // pred_region
      _
    $region69: #{tpu_custom_call.1} parent=1 // pred_fallthru
      _
    // Predicated region
    $region70: #{tpu_custom_call.1} parent=1 // pred_check
      _
    $region71: #{tpu_custom_call.1} parent=1 // pred_check_branch
      %103 = sbr.rel (0) target = $region73
    $region72: #{tpu_custom_call.1} parent=1 // pred_region
      _
    $region73: #{tpu_custom_call.1} parent=1 // pred_fallthru
      _
    // Predicated region
    $region74: #{tpu_custom_call.1} parent=1 // pred_check
      _
    $region75: #{tpu_custom_call.1} parent=1 // pred_check_branch
      %105 = sbr.rel (0) target = $region77
    $region76: #{tpu_custom_call.1} parent=1 // pred_region
      _
    $region77: #{tpu_custom_call.1} parent=1 // pred_fallthru
      _
    // Predicated region
    $region78: #{tpu_custom_call.1} parent=1 // pred_check
      _
    $region79: #{tpu_custom_call.1} parent=1 // pred_check_branch
      %107 = sbr.rel (0) target = $region81
    $region80: #{tpu_custom_call.1} parent=1 // pred_region
      %108 = dma.done [#allocation3], 896
    $region81: #{tpu_custom_call.1} parent=1 // pred_fallthru
      _
    // Predicated region
    $region82: #{tpu_custom_call.1} parent=1 // pred_check
      _
    $region83: #{tpu_custom_call.1} parent=1 // pred_check_branch
      %110 = sbr.rel (0) target = $region85
    $region84: #{tpu_custom_call.1} parent=1 // pred_region
      %111 = dma.done [#allocation6], 16
    $region85: #{tpu_custom_call.1} parent=1 // pred_fallthru
      _
    // Predicated region
    $region86: #{tpu_custom_call.1} parent=1 // pred_check
      _
    $region87: #{tpu_custom_call.1} parent=1 // pred_check_branch
      %113 = sbr.rel (0) target = $region89
    $region88: #{tpu_custom_call.1} parent=1 // pred_region
      %114 = dma.done [#allocation6], 16
    $region89: #{tpu_custom_call.1} parent=1 // pred_fallthru
      _
    // Predicated region
    $region90: #{tpu_custom_call.1} parent=1 // pred_check
      _
    $region91: #{tpu_custom_call.1} parent=1 // pred_check_branch
      %116 = sbr.rel (0) target = $region93
    $region92: #{tpu_custom_call.1} parent=1 // pred_region
      %117 = dma.done [#allocation9], 16
    $region93: #{tpu_custom_call.1} parent=1 // pred_fallthru
      _
    // Predicated region
    $region94: #{tpu_custom_call.1} parent=1 // pred_check
      _
    $region95: #{tpu_custom_call.1} parent=1 // pred_check_branch
      %119 = sbr.rel (0) target = $region97
    $region96: #{tpu_custom_call.1} parent=1 // pred_region
      %120 = dma.done [#allocation9], 16
    $region97: #{tpu_custom_call.1} parent=1 // pred_fallthru
      _
    %v121 = vld [vmem:[#allocation2] sm:$0xff]
    %v122 = vld [vmem:[#allocation2 + $0x8] sm:$0xff]
    %v123 = vld [vmem:[#allocation2 + $0x10] sm:$0xff]
    %v124 = vld [vmem:[#allocation2 + $0x18] sm:$0xff]
    %v125 = vld [vmem:[#allocation2 + $0x20] sm:$0xff]
    %v126 = vld [vmem:[#allocation2 + $0x28] sm:$0xff]
    %v127 = vld [vmem:[#allocation2 + $0x30] sm:$0xff]
    %v128 = vld [vmem:[%s1] sm:$0xff]
    %v129 = vld [vmem:[%s1 + $0x8] sm:$0xff]
    %v130 = vld [vmem:[%s1 + $0x10] sm:$0xff]
    %v131 = vld [vmem:[%s1 + $0x18] sm:$0xff]
    %v132 = vld [vmem:[%s1 + $0x20] sm:$0xff]
    %v133 = vld [vmem:[%s1 + $0x28] sm:$0xff]
    %v134 = vld [vmem:[%s1 + $0x30] sm:$0xff]
    %v135 = vld [vmem:[%s1 + $0x38] sm:$0xff]
    %v136 = vld [vmem:[%s1 + $0x40] sm:$0xff]
    %v137 = vld [vmem:[%s1 + $0x48] sm:$0xff]
    %v138 = vld [vmem:[%s1 + $0x50] sm:$0xff]
    %v139 = vld [vmem:[%s1 + $0x58] sm:$0xff]
    %v140 = vld [vmem:[%s1 + $0x60] sm:$0xff]
    %v141 = vld [vmem:[%s1 + $0x68] sm:$0xff]
    %v142 = vld [vmem:[%s1 + $0x70] sm:$0xff]
    %v143 = vld [vmem:[%s1 + $0x78] sm:$0xff]
    %v144 = vld [vmem:[%s1 + $0x80] sm:$0xff]
    %v145 = vld [vmem:[%s1 + $0x88] sm:$0xff]
    %v146 = vld [vmem:[%s1 + $0x90] sm:$0xff]
    %v147 = vld [vmem:[%s1 + $0x98] sm:$0xff]
    %v148 = vld [vmem:[%s1 + $0xa0] sm:$0xff]
    %v149 = vld [vmem:[%s1 + $0xa8] sm:$0xff]
    %v150 = vld [vmem:[%s1 + $0xb0] sm:$0xff]
    %v151 = vld [vmem:[%s1 + $0xb8] sm:$0xff]
    %v152 = vld [vmem:[%s1 + $0xc0] sm:$0xff]
    %v153 = vld [vmem:[%s1 + $0xc8] sm:$0xff]
    %v154 = vld [vmem:[%s1 + $0xd0] sm:$0xff]
    %v155 = vld [vmem:[%s1 + $0xd8] sm:$0xff]
    %v156 = vld [vmem:[%s1 + $0xe0] sm:$0xff]
    %v157 = vld [vmem:[%s1 + $0xe8] sm:$0xff]
    %v158 = vld [vmem:[%s1 + $0xf0] sm:$0xff]
    %v159 = vld [vmem:[%s1 + $0xf8] sm:$0xff]
    %v160 = vld [vmem:[%s1 + $0x100] sm:$0xff]
    %v161 = vld [vmem:[%s1 + $0x108] sm:$0xff]
    %v162 = vld [vmem:[%s1 + $0x110] sm:$0xff]
    %v163 = vld [vmem:[%s1 + $0x118] sm:$0xff]
    %v164 = vld [vmem:[%s1 + $0x120] sm:$0xff]
    %v165 = vld [vmem:[%s1 + $0x128] sm:$0xff]
    %v166 = vld [vmem:[%s1 + $0x130] sm:$0xff]
    %v167 = vld [vmem:[%s1 + $0x138] sm:$0xff]
    %v168 = vld [vmem:[%s1 + $0x140] sm:$0xff]
    %v169 = vld [vmem:[%s1 + $0x148] sm:$0xff]
    %v170 = vld [vmem:[%s1 + $0x150] sm:$0xff]
    %v171 = vld [vmem:[%s1 + $0x158] sm:$0xff]
    %v172 = vld [vmem:[%s1 + $0x160] sm:$0xff]
    %v173 = vld [vmem:[%s1 + $0x168] sm:$0xff]
    %v174 = vld [vmem:[%s1 + $0x170] sm:$0xff]
    %v175 = vld [vmem:[%s1 + $0x178] sm:$0xff]
    %v176 = vld [vmem:[%s1 + $0x180] sm:$0xff]
    %v177 = vld [vmem:[%s1 + $0x188] sm:$0xff]
    %v178 = vld [vmem:[%s1 + $0x190] sm:$0xff]
    %v179 = vld [vmem:[%s1 + $0x198] sm:$0xff]
    %v180 = vld [vmem:[%s1 + $0x1a0] sm:$0xff]
    %v181 = vld [vmem:[%s1 + $0x1a8] sm:$0xff]
    %v182 = vld [vmem:[%s1 + $0x1b0] sm:$0xff]
    %v183 = vld [vmem:[%s1 + $0x1b8] sm:$0xff]
    %v184 = vld [vmem:[%s1 + $0x1c0] sm:$0xff]
    %v185 = vld [vmem:[%s1 + $0x1c8] sm:$0xff]
    %v186 = vld [vmem:[%s1 + $0x1d0] sm:$0xff]
    %v187 = vld [vmem:[%s1 + $0x1d8] sm:$0xff]
    %v188 = vld [vmem:[%s1 + $0x1e0] sm:$0xff]
    %v189 = vld [vmem:[%s1 + $0x1e8] sm:$0xff]
    %v190 = vld [vmem:[%s1 + $0x1f0] sm:$0xff]
    %v191 = vld [vmem:[%s1 + $0x1f8] sm:$0xff]
    %v192 = vld [vmem:[%s1 + $0x200] sm:$0xff]
    %v193 = vld [vmem:[%s1 + $0x208] sm:$0xff]
    %v194 = vld [vmem:[%s1 + $0x210] sm:$0xff]
    %v195 = vld [vmem:[%s1 + $0x218] sm:$0xff]
    %v196 = vld [vmem:[%s1 + $0x220] sm:$0xff]
    %v197 = vld [vmem:[%s1 + $0x228] sm:$0xff]
    %v198 = vld [vmem:[%s1 + $0x230] sm:$0xff]
    %v199 = vld [vmem:[%s1 + $0x238] sm:$0xff]
    %v200 = vld [vmem:[%s1 + $0x240] sm:$0xff]
    %v201 = vld [vmem:[%s1 + $0x248] sm:$0xff]
    %v202 = vld [vmem:[%s1 + $0x250] sm:$0xff]
    %v203 = vld [vmem:[%s1 + $0x258] sm:$0xff]
    %v204 = vld [vmem:[%s1 + $0x260] sm:$0xff]
    %v205 = vld [vmem:[%s1 + $0x268] sm:$0xff]
    %v206 = vld [vmem:[%s1 + $0x270] sm:$0xff]
    %v207 = vld [vmem:[%s1 + $0x278] sm:$0xff]
    %v208 = vld [vmem:[%s1 + $0x280] sm:$0xff]
    %v209 = vld [vmem:[%s1 + $0x288] sm:$0xff]
    %v210 = vld [vmem:[%s1 + $0x290] sm:$0xff]
    %v211 = vld [vmem:[%s1 + $0x298] sm:$0xff]
    %v212 = vld [vmem:[%s1 + $0x2a0] sm:$0xff]
    %v213 = vld [vmem:[%s1 + $0x2a8] sm:$0xff]
    %v214 = vld [vmem:[%s1 + $0x2b0] sm:$0xff]
    %v215 = vld [vmem:[%s1 + $0x2b8] sm:$0xff]
    %v216 = vld [vmem:[%s1 + $0x2c0] sm:$0xff]
    %v217 = vld [vmem:[%s1 + $0x2c8] sm:$0xff]
    %v218 = vld [vmem:[%s1 + $0x2d0] sm:$0xff]
    %v219 = vld [vmem:[%s1 + $0x2d8] sm:$0xff]
    %v220 = vld [vmem:[%s1 + $0x2e0] sm:$0xff]
    %v221 = vld [vmem:[%s1 + $0x2e8] sm:$0xff]
    %v222 = vld [vmem:[%s1 + $0x2f0] sm:$0xff]
    %v223 = vld [vmem:[%s1 + $0x2f8] sm:$0xff]
    %v224 = vld [vmem:[%s1 + $0x300] sm:$0xff]
    %v225 = vld [vmem:[%s1 + $0x308] sm:$0xff]
    %v226 = vld [vmem:[#allocation5] sm:$0x1]
    %v228 = vlaneseq
    %v229 = vshrl.u32 %v228, 7
    %v230 = vsub.s32 0, %v229
    %v231 = vrot.slane %v226, %v230
    %vm233 = vcmask 130048
    %v235 = vsel %vm233, %v127, 0
    %237 = vmatprep.subr.mxu0 0.0
    %238 = vmatpush1.msra.mxu0 %v143
    %239 = vmatprep.subr.mxu0 0.0
    %240 = vmatpush1.msra.mxu0 %v142
    %241 = vmatprep.subr.mxu0 0.0
    %242 = vmatpush1.msra.mxu0 %v141
    %243 = vmatprep.subr.mxu0 0.0
    %244 = vmatpush1.msra.mxu0 %v140
    %245 = vmatprep.subr.mxu0 0.0
    %246 = vmatpush1.msra.mxu0 %v139
    %247 = vmatprep.subr.mxu0 0.0
    %248 = vmatpush1.msra.mxu0 %v138
    %249 = vmatprep.subr.mxu0 0.0
    %250 = vmatpush1.msra.mxu0 %v137
    %251 = vmatprep.subr.mxu0 0.0
    %252 = vmatpush1.msra.mxu0 %v136
    %253 = vmatprep.subr.mxu0 0.0
    %254 = vmatpush1.msra.mxu0 %v135
    %255 = vmatprep.subr.mxu0 0.0
    %256 = vmatpush1.msra.mxu0 %v134
    %257 = vmatprep.subr.mxu0 0.0
    %258 = vmatpush1.msra.mxu0 %v133
    %259 = vmatprep.subr.mxu0 0.0
    %260 = vmatpush1.msra.mxu0 %v132
    %261 = vmatprep.subr.mxu0 0.0
    %262 = vmatpush1.msra.mxu0 %v131
    %263 = vmatprep.subr.mxu0 0.0
    %264 = vmatpush1.msra.mxu0 %v130
    %265 = vmatprep.subr.mxu0 0.0
    %266 = vmatpush1.msra.mxu0 %v129
    %267 = vmatprep.subr.mxu0 0.0
    %268 = vmatpush1.msra.mxu0 %v128
    %269 = vmatprep.subr.mxu0 0.0
    %270 = vmatpush2.msra.mxu0 %v159
    %271 = vmatprep.subr.mxu0 0.0
    %272 = vmatpush2.msra.mxu0 %v158
    %273 = vmatprep.subr.mxu0 0.0
    %274 = vmatpush2.msra.mxu0 %v157
    %275 = vmatprep.subr.mxu0 0.0
    %276 = vmatpush2.msra.mxu0 %v156
    %277 = vmatprep.subr.mxu0 0.0
    %278 = vmatpush2.msra.mxu0 %v155
    %279 = vmatprep.subr.mxu0 0.0
    %280 = vmatpush2.msra.mxu0 %v154
    %281 = vmatprep.subr.mxu0 0.0
    %282 = vmatpush2.msra.mxu0 %v153
    %283 = vmatprep.subr.mxu0 0.0
    %284 = vmatpush2.msra.mxu0 %v152
    %285 = vmatprep.subr.mxu0 0.0
    %286 = vmatpush2.msra.mxu0 %v151
    %287 = vmatprep.subr.mxu0 0.0
    %288 = vmatpush2.msra.mxu0 %v150
    %289 = vmatprep.subr.mxu0 0.0
    %290 = vmatpush2.msra.mxu0 %v149
    %291 = vmatprep.subr.mxu0 0.0
    %292 = vmatpush2.msra.mxu0 %v148
    %293 = vmatprep.subr.mxu0 0.0
    %294 = vmatpush2.msra.mxu0 %v147
    %295 = vmatprep.subr.mxu0 0.0
    %296 = vmatpush2.msra.mxu0 %v146
    %297 = vmatprep.subr.mxu0 0.0
    %298 = vmatpush2.msra.mxu0 %v145
    %299 = vmatprep.subr.mxu0 0.0
    %300 = vmatpush2.msra.mxu0 %v144
    %301 = vmatprep.mubr.f32.mxu0 %v122
    %302 = vmatmul.mubr.f32.gmra.mxu0 %v121
    %v303 = vpop.f32.mrf.mxu0
    %v304 = vadd.f32 %v231, %v303
    %v305 = vpop.f32.mrf.mxu0
    %306 = vdwg.mxu0
    %307 = vmatprep.subr.mxu0 0.0
    %308 = vmatpush1.msra.mxu0 %v175
    %309 = vmatprep.subr.mxu0 0.0
    %310 = vmatpush1.msra.mxu0 %v174
    %311 = vmatprep.subr.mxu0 0.0
    %312 = vmatpush1.msra.mxu0 %v173
    %313 = vmatprep.subr.mxu0 0.0
    %314 = vmatpush1.msra.mxu0 %v172
    %315 = vmatprep.subr.mxu0 0.0
    %316 = vmatpush1.msra.mxu0 %v171
    %317 = vmatprep.subr.mxu0 0.0
    %318 = vmatpush1.msra.mxu0 %v170
    %319 = vmatprep.subr.mxu0 0.0
    %320 = vmatpush1.msra.mxu0 %v169
    %321 = vmatprep.subr.mxu0 0.0
    %322 = vmatpush1.msra.mxu0 %v168
    %323 = vmatprep.subr.mxu0 0.0
    %324 = vmatpush1.msra.mxu0 %v167
    %325 = vmatprep.subr.mxu0 0.0
    %326 = vmatpush1.msra.mxu0 %v166
    %327 = vmatprep.subr.mxu0 0.0
    %328 = vmatpush1.msra.mxu0 %v165
    %329 = vmatprep.subr.mxu0 0.0
    %330 = vmatpush1.msra.mxu0 %v164
    %331 = vmatprep.subr.mxu0 0.0
    %332 = vmatpush1.msra.mxu0 %v163
    %333 = vmatprep.subr.mxu0 0.0
    %334 = vmatpush1.msra.mxu0 %v162
    %335 = vmatprep.subr.mxu0 0.0
    %336 = vmatpush1.msra.mxu0 %v161
    %337 = vmatprep.subr.mxu0 0.0
    %338 = vmatpush1.msra.mxu0 %v160
    %339 = vmatprep.subr.mxu0 0.0
    %340 = vmatpush2.msra.mxu0 %v191
    %341 = vmatprep.subr.mxu0 0.0
    %342 = vmatpush2.msra.mxu0 %v190
    %343 = vmatprep.subr.mxu0 0.0
    %344 = vmatpush2.msra.mxu0 %v189
    %345 = vmatprep.subr.mxu0 0.0
    %346 = vmatpush2.msra.mxu0 %v188
    %347 = vmatprep.subr.mxu0 0.0
    %348 = vmatpush2.msra.mxu0 %v187
    %349 = vmatprep.subr.mxu0 0.0
    %350 = vmatpush2.msra.mxu0 %v186
    %351 = vmatprep.subr.mxu0 0.0
    %352 = vmatpush2.msra.mxu0 %v185
    %353 = vmatprep.subr.mxu0 0.0
    %354 = vmatpush2.msra.mxu0 %v184
    %355 = vmatprep.subr.mxu0 0.0
    %356 = vmatpush2.msra.mxu0 %v183
    %357 = vmatprep.subr.mxu0 0.0
    %358 = vmatpush2.msra.mxu0 %v182
    %359 = vmatprep.subr.mxu0 0.0
    %360 = vmatpush2.msra.mxu0 %v181
    %361 = vmatprep.subr.mxu0 0.0
    %362 = vmatpush2.msra.mxu0 %v180
    %363 = vmatprep.subr.mxu0 0.0
    %364 = vmatpush2.msra.mxu0 %v179
    %365 = vmatprep.subr.mxu0 0.0
    %366 = vmatpush2.msra.mxu0 %v178
    %367 = vmatprep.subr.mxu0 0.0
    %368 = vmatpush2.msra.mxu0 %v177
    %369 = vmatprep.subr.mxu0 0.0
    %370 = vmatpush2.msra.mxu0 %v176
    %371 = vmatprep.mubr.f32.mxu0 %v124
    %372 = vmatmul.mubr.f32.gmra.mxu0 %v123
    %v373 = vpop.f32.mrf.mxu0
    %v374 = vadd.f32 %v304, %v373
    %v375 = vpop.f32.mrf.mxu0
    %376 = vdwg.mxu0
    %377 = vmatprep.subr.mxu0 0.0
    %378 = vmatpush1.msra.mxu0 %v207
    %379 = vmatprep.subr.mxu0 0.0
    %380 = vmatpush1.msra.mxu0 %v206
    %381 = vmatprep.subr.mxu0 0.0
    %382 = vmatpush1.msra.mxu0 %v205
    %383 = vmatprep.subr.mxu0 0.0
    %384 = vmatpush1.msra.mxu0 %v204
    %385 = vmatprep.subr.mxu0 0.0
    %386 = vmatpush1.msra.mxu0 %v203
    %387 = vmatprep.subr.mxu0 0.0
    %388 = vmatpush1.msra.mxu0 %v202
    %389 = vmatprep.subr.mxu0 0.0
    %390 = vmatpush1.msra.mxu0 %v201
    %391 = vmatprep.subr.mxu0 0.0
    %392 = vmatpush1.msra.mxu0 %v200
    %393 = vmatprep.subr.mxu0 0.0
    %394 = vmatpush1.msra.mxu0 %v199
    %395 = vmatprep.subr.mxu0 0.0
    %396 = vmatpush1.msra.mxu0 %v198
    %397 = vmatprep.subr.mxu0 0.0
    %398 = vmatpush1.msra.mxu0 %v197
    %399 = vmatprep.subr.mxu0 0.0
    %400 = vmatpush1.msra.mxu0 %v196
    %401 = vmatprep.subr.mxu0 0.0
    %402 = vmatpush1.msra.mxu0 %v195
    %403 = vmatprep.subr.mxu0 0.0
    %404 = vmatpush1.msra.mxu0 %v194
    %405 = vmatprep.subr.mxu0 0.0
    %406 = vmatpush1.msra.mxu0 %v193
    %407 = vmatprep.subr.mxu0 0.0
    %408 = vmatpush1.msra.mxu0 %v192
    %409 = vmatprep.subr.mxu0 0.0
    %410 = vmatpush2.msra.mxu0 %v223
    %411 = vmatprep.subr.mxu0 0.0
    %412 = vmatpush2.msra.mxu0 %v222
    %413 = vmatprep.subr.mxu0 0.0
    %414 = vmatpush2.msra.mxu0 %v221
    %415 = vmatprep.subr.mxu0 0.0
    %416 = vmatpush2.msra.mxu0 %v220
    %417 = vmatprep.subr.mxu0 0.0
    %418 = vmatpush2.msra.mxu0 %v219
    %419 = vmatprep.subr.mxu0 0.0
    %420 = vmatpush2.msra.mxu0 %v218
    %421 = vmatprep.subr.mxu0 0.0
    %422 = vmatpush2.msra.mxu0 %v217
    %423 = vmatprep.subr.mxu0 0.0
    %424 = vmatpush2.msra.mxu0 %v216
    %425 = vmatprep.subr.mxu0 0.0
    %426 = vmatpush2.msra.mxu0 %v215
    %427 = vmatprep.subr.mxu0 0.0
    %428 = vmatpush2.msra.mxu0 %v214
    %429 = vmatprep.subr.mxu0 0.0
    %430 = vmatpush2.msra.mxu0 %v213
    %431 = vmatprep.subr.mxu0 0.0
    %432 = vmatpush2.msra.mxu0 %v212
    %433 = vmatprep.subr.mxu0 0.0
    %434 = vmatpush2.msra.mxu0 %v211
    %435 = vmatprep.subr.mxu0 0.0
    %436 = vmatpush2.msra.mxu0 %v210
    %437 = vmatprep.subr.mxu0 0.0
    %438 = vmatpush2.msra.mxu0 %v209
    %439 = vmatprep.subr.mxu0 0.0
    %440 = vmatpush2.msra.mxu0 %v208
    %441 = vmatprep.mubr.f32.mxu0 %v126
    %442 = vmatmul.mubr.f32.gmra.mxu0 %v125
    %v443 = vpop.f32.mrf.mxu0
    %v444 = vadd.f32 %v374, %v443
    %v445 = vpop.f32.mrf.mxu0
    %446 = vdwg.mxu0
    %447 = vmatprep.subr.mxu0 0.0
    %448 = vmatpush1.msra.mxu0 0.0
    %449 = vmatprep.subr.mxu0 0.0
    %450 = vmatpush1.msra.mxu0 0.0
    %451 = vmatprep.subr.mxu0 0.0
    %452 = vmatpush1.msra.mxu0 0.0
    %453 = vmatprep.subr.mxu0 0.0
    %454 = vmatpush1.msra.mxu0 0.0
    %455 = vmatprep.subr.mxu0 0.0
    %456 = vmatpush1.msra.mxu0 0.0
    %457 = vmatprep.subr.mxu0 0.0
    %458 = vmatpush1.msra.mxu0 0.0
    %459 = vmatprep.subr.mxu0 0.0
    %460 = vmatpush1.msra.mxu0 0.0
    %461 = vmatprep.subr.mxu0 0.0
    %462 = vmatpush1.msra.mxu0 0.0
    %463 = vmatprep.subr.mxu0 0.0
    %464 = vmatpush1.msra.mxu0 0.0
    %465 = vmatprep.subr.mxu0 0.0
    %466 = vmatpush1.msra.mxu0 0.0
    %467 = vmatprep.subr.mxu0 0.0
    %468 = vmatpush1.msra.mxu0 0.0
    %469 = vmatprep.subr.mxu0 0.0
    %470 = vmatpush1.msra.mxu0 0.0
    %471 = vmatprep.subr.mxu0 0.0
    %472 = vmatpush1.msra.mxu0 0.0
    %473 = vmatprep.subr.mxu0 0.0
    %474 = vmatpush1.msra.mxu0 0.0
    %475 = vmatprep.subr.mxu0 0.0
    %476 = vmatpush1.msra.mxu0 %v225
    %477 = vmatprep.subr.mxu0 0.0
    %478 = vmatpush1.msra.mxu0 %v224
    %479 = vmatprep.subr.mxu0 0.0
    %480 = vmatpush2.msra.mxu0 0.0
    %481 = vmatprep.subr.mxu0 0.0
    %482 = vmatpush2.msra.mxu0 0.0
    %483 = vmatprep.subr.mxu0 0.0
    %484 = vmatpush2.msra.mxu0 0.0
    %485 = vmatprep.subr.mxu0 0.0
    %486 = vmatpush2.msra.mxu0 0.0
    %487 = vmatprep.subr.mxu0 0.0
    %488 = vmatpush2.msra.mxu0 0.0
    %489 = vmatprep.subr.mxu0 0.0
    %490 = vmatpush2.msra.mxu0 0.0
    %491 = vmatprep.subr.mxu0 0.0
    %492 = vmatpush2.msra.mxu0 0.0
    %493 = vmatprep.subr.mxu0 0.0
    %494 = vmatpush2.msra.mxu0 0.0
    %495 = vmatprep.subr.mxu0 0.0
    %496 = vmatpush2.msra.mxu0 0.0
    %497 = vmatprep.subr.mxu0 0.0
    %498 = vmatpush2.msra.mxu0 0.0
    %499 = vmatprep.subr.mxu0 0.0
    %500 = vmatpush2.msra.mxu0 0.0
    %501 = vmatprep.subr.mxu0 0.0
    %502 = vmatpush2.msra.mxu0 0.0
    %503 = vmatprep.subr.mxu0 0.0
    %504 = vmatpush2.msra.mxu0 0.0
    %505 = vmatprep.subr.mxu0 0.0
    %506 = vmatpush2.msra.mxu0 0.0
    %507 = vmatprep.subr.mxu0 0.0
    %508 = vmatpush2.msra.mxu0 0.0
    %509 = vmatprep.subr.mxu0 0.0
    %510 = vmatpush2.msra.mxu0 0.0
    %511 = vmatprep.mubr.f32.mxu0 0.0
    %512 = vmatmul.mubr.f32.gmra.mxu0 %v235
    %v513 = vpop.f32.mrf.mxu0
    %v514 = vadd.f32 %v444, %v513
    %v515 = vpop.f32.mrf.mxu0
    %516 = vdwg.mxu0
    %v517 = vmax.f32 %v514, 0.0
    %v518 = vld [vmem:[%s3] sm:$0xff]
    %v519 = vld [vmem:[%s3 + $0x8] sm:$0xff]
    %v520 = vld [vmem:[%s3 + $0x10] sm:$0xff]
    %v521 = vld [vmem:[%s3 + $0x18] sm:$0xff]
    %v522 = vld [vmem:[%s3 + $0x20] sm:$0xff]
    %v523 = vld [vmem:[%s3 + $0x28] sm:$0xff]
    %v524 = vld [vmem:[%s3 + $0x30] sm:$0xff]
    %v525 = vld [vmem:[%s3 + $0x38] sm:$0xff]
    %v526 = vld [vmem:[%s3 + $0x40] sm:$0xff]
    %v527 = vld [vmem:[%s3 + $0x48] sm:$0xff]
    %v528 = vld [vmem:[%s3 + $0x50] sm:$0xff]
    %v529 = vld [vmem:[%s3 + $0x58] sm:$0xff]
    %v530 = vld [vmem:[%s3 + $0x60] sm:$0xff]
    %v531 = vld [vmem:[%s3 + $0x68] sm:$0xff]
    %v532 = vld [vmem:[%s3 + $0x70] sm:$0xff]
    %v533 = vld [vmem:[%s3 + $0x78] sm:$0xff]
    %v534 = vld [vmem:[#allocation7] sm:$0x1]
    %v536 = vlaneseq
    %v537 = vshrl.u32 %v536, 7
    %v538 = vsub.s32 0, %v537
    %v539 = vrot.slane %v534, %v538
    %541 = vmatprep.subr.mxu0 0.0
    %542 = vmatpush1.msra.mxu0 %v533
    %543 = vmatprep.subr.mxu0 0.0
    %544 = vmatpush1.msra.mxu0 %v532
    %545 = vmatprep.subr.mxu0 0.0
    %546 = vmatpush1.msra.mxu0 %v531
    %547 = vmatprep.subr.mxu0 0.0
    %548 = vmatpush1.msra.mxu0 %v530
    %549 = vmatprep.subr.mxu0 0.0
    %550 = vmatpush1.msra.mxu0 %v529
    %551 = vmatprep.subr.mxu0 0.0
    %552 = vmatpush1.msra.mxu0 %v528
    %553 = vmatprep.subr.mxu0 0.0
    %554 = vmatpush1.msra.mxu0 %v527
    %555 = vmatprep.subr.mxu0 0.0
    %556 = vmatpush1.msra.mxu0 %v526
    %557 = vmatprep.subr.mxu0 0.0
    %558 = vmatpush1.msra.mxu0 %v525
    %559 = vmatprep.subr.mxu0 0.0
    %560 = vmatpush1.msra.mxu0 %v524
    %561 = vmatprep.subr.mxu0 0.0
    %562 = vmatpush1.msra.mxu0 %v523
    %563 = vmatprep.subr.mxu0 0.0
    %564 = vmatpush1.msra.mxu0 %v522
    %565 = vmatprep.subr.mxu0 0.0
    %566 = vmatpush1.msra.mxu0 %v521
    %567 = vmatprep.subr.mxu0 0.0
    %568 = vmatpush1.msra.mxu0 %v520
    %569 = vmatprep.subr.mxu0 0.0
    %570 = vmatpush1.msra.mxu0 %v519
    %571 = vmatprep.subr.mxu0 0.0
    %572 = vmatpush1.msra.mxu0 %v518
    %573 = vmatprep.subr.mxu0 0.0
    %574 = vmatpush2.msra.mxu0 0.0
    %575 = vmatprep.subr.mxu0 0.0
    %576 = vmatpush2.msra.mxu0 0.0
    %577 = vmatprep.subr.mxu0 0.0
    %578 = vmatpush2.msra.mxu0 0.0
    %579 = vmatprep.subr.mxu0 0.0
    %580 = vmatpush2.msra.mxu0 0.0
    %581 = vmatprep.subr.mxu0 0.0
    %582 = vmatpush2.msra.mxu0 0.0
    %583 = vmatprep.subr.mxu0 0.0
    %584 = vmatpush2.msra.mxu0 0.0
    %585 = vmatprep.subr.mxu0 0.0
    %586 = vmatpush2.msra.mxu0 0.0
    %587 = vmatprep.subr.mxu0 0.0
    %588 = vmatpush2.msra.mxu0 0.0
    %589 = vmatprep.subr.mxu0 0.0
    %590 = vmatpush2.msra.mxu0 0.0
    %591 = vmatprep.subr.mxu0 0.0
    %592 = vmatpush2.msra.mxu0 0.0
    %593 = vmatprep.subr.mxu0 0.0
    %594 = vmatpush2.msra.mxu0 0.0
    %595 = vmatprep.subr.mxu0 0.0
    %596 = vmatpush2.msra.mxu0 0.0
    %597 = vmatprep.subr.mxu0 0.0
    %598 = vmatpush2.msra.mxu0 0.0
    %599 = vmatprep.subr.mxu0 0.0
    %600 = vmatpush2.msra.mxu0 0.0
    %601 = vmatprep.subr.mxu0 0.0
    %602 = vmatpush2.msra.mxu0 0.0
    %603 = vmatprep.subr.mxu0 0.0
    %604 = vmatpush2.msra.mxu0 0.0
    %605 = vmatprep.mubr.f32.mxu0 0.0
    %606 = vmatmul.mubr.f32.gmra.mxu0 %v517
    %v607 = vpop.f32.mrf.mxu0
    %v608 = vadd.f32 %v539, %v607
    %v609 = vpop.f32.mrf.mxu0
    %610 = vdwg.mxu0
    %v611 = vmax.f32 %v608, 0.0
    %v612 = vld [vmem:[%s5] sm:$0xff]
    %v613 = vld [vmem:[%s5 + $0x8] sm:$0xff]
    %v614 = vld [vmem:[%s5 + $0x10] sm:$0xff]
    %v615 = vld [vmem:[%s5 + $0x18] sm:$0xff]
    %v616 = vld [vmem:[%s5 + $0x20] sm:$0xff]
    %v617 = vld [vmem:[%s5 + $0x28] sm:$0xff]
    %v618 = vld [vmem:[%s5 + $0x30] sm:$0xff]
    %v619 = vld [vmem:[%s5 + $0x38] sm:$0xff]
    %v620 = vld [vmem:[%s5 + $0x40] sm:$0xff]
    %v621 = vld [vmem:[%s5 + $0x48] sm:$0xff]
    %v622 = vld [vmem:[%s5 + $0x50] sm:$0xff]
    %v623 = vld [vmem:[%s5 + $0x58] sm:$0xff]
    %v624 = vld [vmem:[%s5 + $0x60] sm:$0xff]
    %v625 = vld [vmem:[%s5 + $0x68] sm:$0xff]
    %v626 = vld [vmem:[%s5 + $0x70] sm:$0xff]
    %v627 = vld [vmem:[%s5 + $0x78] sm:$0xff]
    %v628 = vld [vmem:[#allocation8] sm:$0x1]
    %v630 = vlaneseq
    %v631 = vshrl.u32 %v630, 7
    %v632 = vsub.s32 0, %v631
    %v633 = vrot.slane %v628, %v632
    %635 = vmatprep.subr.mxu0 0.0
    %636 = vmatpush1.msra.mxu0 %v627
    %637 = vmatprep.subr.mxu0 0.0
    %638 = vmatpush1.msra.mxu0 %v626
    %639 = vmatprep.subr.mxu0 0.0
    %640 = vmatpush1.msra.mxu0 %v625
    %641 = vmatprep.subr.mxu0 0.0
    %642 = vmatpush1.msra.mxu0 %v624
    %643 = vmatprep.subr.mxu0 0.0
    %644 = vmatpush1.msra.mxu0 %v623
    %645 = vmatprep.subr.mxu0 0.0
    %646 = vmatpush1.msra.mxu0 %v622
    %647 = vmatprep.subr.mxu0 0.0
    %648 = vmatpush1.msra.mxu0 %v621
    %649 = vmatprep.subr.mxu0 0.0
    %650 = vmatpush1.msra.mxu0 %v620
    %651 = vmatprep.subr.mxu0 0.0
    %652 = vmatpush1.msra.mxu0 %v619
    %653 = vmatprep.subr.mxu0 0.0
    %654 = vmatpush1.msra.mxu0 %v618
    %655 = vmatprep.subr.mxu0 0.0
    %656 = vmatpush1.msra.mxu0 %v617
    %657 = vmatprep.subr.mxu0 0.0
    %658 = vmatpush1.msra.mxu0 %v616
    %659 = vmatprep.subr.mxu0 0.0
    %660 = vmatpush1.msra.mxu0 %v615
    %661 = vmatprep.subr.mxu0 0.0
    %662 = vmatpush1.msra.mxu0 %v614
    %663 = vmatprep.subr.mxu0 0.0
    %664 = vmatpush1.msra.mxu0 %v613
    %665 = vmatprep.subr.mxu0 0.0
    %666 = vmatpush1.msra.mxu0 %v612
    %667 = vmatprep.subr.mxu0 0.0
    %668 = vmatpush2.msra.mxu0 0.0
    %669 = vmatprep.subr.mxu0 0.0
    %670 = vmatpush2.msra.mxu0 0.0
    %671 = vmatprep.subr.mxu0 0.0
    %672 = vmatpush2.msra.mxu0 0.0
    %673 = vmatprep.subr.mxu0 0.0
    %674 = vmatpush2.msra.mxu0 0.0
    %675 = vmatprep.subr.mxu0 0.0
    %676 = vmatpush2.msra.mxu0 0.0
    %677 = vmatprep.subr.mxu0 0.0
    %678 = vmatpush2.msra.mxu0 0.0
    %679 = vmatprep.subr.mxu0 0.0
    %680 = vmatpush2.msra.mxu0 0.0
    %681 = vmatprep.subr.mxu0 0.0
    %682 = vmatpush2.msra.mxu0 0.0
    %683 = vmatprep.subr.mxu0 0.0
    %684 = vmatpush2.msra.mxu0 0.0
    %685 = vmatprep.subr.mxu0 0.0
    %686 = vmatpush2.msra.mxu0 0.0
    %687 = vmatprep.subr.mxu0 0.0
    %688 = vmatpush2.msra.mxu0 0.0
    %689 = vmatprep.subr.mxu0 0.0
    %690 = vmatpush2.msra.mxu0 0.0
    %691 = vmatprep.subr.mxu0 0.0
    %692 = vmatpush2.msra.mxu0 0.0
    %693 = vmatprep.subr.mxu0 0.0
    %694 = vmatpush2.msra.mxu0 0.0
    %695 = vmatprep.subr.mxu0 0.0
    %696 = vmatpush2.msra.mxu0 0.0
    %697 = vmatprep.subr.mxu0 0.0
    %698 = vmatpush2.msra.mxu0 0.0
    %699 = vmatprep.mubr.f32.mxu0 0.0
    %700 = vmatmul.mubr.f32.gmra.mxu0 %v611
    %v701 = vpop.f32.mrf.mxu0
    %v702 = vadd.f32 %v633, %v701
    %v703 = vpop.f32.mrf.mxu0
    %704 = vdwg.mxu0
    %v705 = vmax.f32 %v702, 0.0
    %v706 = vld [vmem:[%s7] sm:$0xff]
    %v707 = vld [vmem:[%s7 + $0x8] sm:$0xff]
    %v708 = vld [vmem:[%s7 + $0x10] sm:$0xff]
    %v709 = vld [vmem:[%s7 + $0x18] sm:$0xff]
    %v710 = vld [vmem:[%s7 + $0x20] sm:$0xff]
    %v711 = vld [vmem:[%s7 + $0x28] sm:$0xff]
    %v712 = vld [vmem:[%s7 + $0x30] sm:$0xff]
    %v713 = vld [vmem:[%s7 + $0x38] sm:$0xff]
    %v714 = vld [vmem:[%s7 + $0x40] sm:$0xff]
    %v715 = vld [vmem:[%s7 + $0x48] sm:$0xff]
    %v716 = vld [vmem:[%s7 + $0x50] sm:$0xff]
    %v717 = vld [vmem:[%s7 + $0x58] sm:$0xff]
    %v718 = vld [vmem:[%s7 + $0x60] sm:$0xff]
    %v719 = vld [vmem:[%s7 + $0x68] sm:$0xff]
    %v720 = vld [vmem:[%s7 + $0x70] sm:$0xff]
    %v721 = vld [vmem:[%s7 + $0x78] sm:$0xff]
    %v722 = vld [vmem:[#allocation10] sm:$0x1]
    %v724 = vlaneseq
    %v725 = vshrl.u32 %v724, 7
    %v726 = vsub.s32 0, %v725
    %v727 = vrot.slane %v722, %v726
    %729 = vmatprep.subr.mxu0 0.0
    %730 = vmatpush1.msra.mxu0 %v721
    %731 = vmatprep.subr.mxu0 0.0
    %732 = vmatpush1.msra.mxu0 %v720
    %733 = vmatprep.subr.mxu0 0.0
    %734 = vmatpush1.msra.mxu0 %v719
    %735 = vmatprep.subr.mxu0 0.0
    %736 = vmatpush1.msra.mxu0 %v718
    %737 = vmatprep.subr.mxu0 0.0
    %738 = vmatpush1.msra.mxu0 %v717
    %739 = vmatprep.subr.mxu0 0.0
    %740 = vmatpush1.msra.mxu0 %v716
    %741 = vmatprep.subr.mxu0 0.0
    %742 = vmatpush1.msra.mxu0 %v715
    %743 = vmatprep.subr.mxu0 0.0
    %744 = vmatpush1.msra.mxu0 %v714
    %745 = vmatprep.subr.mxu0 0.0
    %746 = vmatpush1.msra.mxu0 %v713
    %747 = vmatprep.subr.mxu0 0.0
    %748 = vmatpush1.msra.mxu0 %v712
    %749 = vmatprep.subr.mxu0 0.0
    %750 = vmatpush1.msra.mxu0 %v711
    %751 = vmatprep.subr.mxu0 0.0
    %752 = vmatpush1.msra.mxu0 %v710
    %753 = vmatprep.subr.mxu0 0.0
    %754 = vmatpush1.msra.mxu0 %v709
    %755 = vmatprep.subr.mxu0 0.0
    %756 = vmatpush1.msra.mxu0 %v708
    %757 = vmatprep.subr.mxu0 0.0
    %758 = vmatpush1.msra.mxu0 %v707
    %759 = vmatprep.subr.mxu0 0.0
    %760 = vmatpush1.msra.mxu0 %v706
    %761 = vmatprep.subr.mxu0 0.0
    %762 = vmatpush2.msra.mxu0 0.0
    %763 = vmatprep.subr.mxu0 0.0
    %764 = vmatpush2.msra.mxu0 0.0
    %765 = vmatprep.subr.mxu0 0.0
    %766 = vmatpush2.msra.mxu0 0.0
    %767 = vmatprep.subr.mxu0 0.0
    %768 = vmatpush2.msra.mxu0 0.0
    %769 = vmatprep.subr.mxu0 0.0
    %770 = vmatpush2.msra.mxu0 0.0
    %771 = vmatprep.subr.mxu0 0.0
    %772 = vmatpush2.msra.mxu0 0.0
    %773 = vmatprep.subr.mxu0 0.0
    %774 = vmatpush2.msra.mxu0 0.0
    %775 = vmatprep.subr.mxu0 0.0
    %776 = vmatpush2.msra.mxu0 0.0
    %777 = vmatprep.subr.mxu0 0.0
    %778 = vmatpush2.msra.mxu0 0.0
    %779 = vmatprep.subr.mxu0 0.0
    %780 = vmatpush2.msra.mxu0 0.0
    %781 = vmatprep.subr.mxu0 0.0
    %782 = vmatpush2.msra.mxu0 0.0
    %783 = vmatprep.subr.mxu0 0.0
    %784 = vmatpush2.msra.mxu0 0.0
    %785 = vmatprep.subr.mxu0 0.0
    %786 = vmatpush2.msra.mxu0 0.0
    %787 = vmatprep.subr.mxu0 0.0
    %788 = vmatpush2.msra.mxu0 0.0
    %789 = vmatprep.subr.mxu0 0.0
    %790 = vmatpush2.msra.mxu0 0.0
    %791 = vmatprep.subr.mxu0 0.0
    %792 = vmatpush2.msra.mxu0 0.0
    %793 = vmatprep.mubr.f32.mxu0 0.0
    %794 = vmatmul.mubr.f32.gmra.mxu0 %v705
    %v795 = vpop.f32.mrf.mxu0
    %v796 = vadd.f32 %v727, %v795
    %v797 = vpop.f32.mrf.mxu0
    %798 = vdwg.mxu0
    %v799 = vmax.f32 %v796, 0.0
    %v800 = vld [vmem:[%s9] sm:$0xff]
    %v801 = vld [vmem:[%s9 + $0x8] sm:$0xff]
    %v802 = vld [vmem:[%s9 + $0x10] sm:$0xff]
    %v803 = vld [vmem:[%s9 + $0x18] sm:$0xff]
    %v804 = vld [vmem:[%s9 + $0x20] sm:$0xff]
    %v805 = vld [vmem:[%s9 + $0x28] sm:$0xff]
    %v806 = vld [vmem:[%s9 + $0x30] sm:$0xff]
    %v807 = vld [vmem:[%s9 + $0x38] sm:$0xff]
    %v808 = vld [vmem:[%s9 + $0x40] sm:$0xff]
    %v809 = vld [vmem:[%s9 + $0x48] sm:$0xff]
    %v810 = vld [vmem:[%s9 + $0x50] sm:$0xff]
    %v811 = vld [vmem:[%s9 + $0x58] sm:$0xff]
    %v812 = vld [vmem:[%s9 + $0x60] sm:$0xff]
    %v813 = vld [vmem:[%s9 + $0x68] sm:$0xff]
    %v814 = vld [vmem:[%s9 + $0x70] sm:$0xff]
    %v815 = vld [vmem:[%s9 + $0x78] sm:$0xff]
    %v816 = vld [vmem:[%s10] sm:$0x1]
    %v818 = vlaneseq
    %v819 = vshrl.u32 %v818, 7
    %v820 = vsub.s32 0, %v819
    %v821 = vrot.slane %v816, %v820
    %823 = vmatprep.subr.mxu0 0.0
    %824 = vmatpush1.msra.mxu0 %v815
    %825 = vmatprep.subr.mxu0 0.0
    %826 = vmatpush1.msra.mxu0 %v814
    %827 = vmatprep.subr.mxu0 0.0
    %828 = vmatpush1.msra.mxu0 %v813
    %829 = vmatprep.subr.mxu0 0.0
    %830 = vmatpush1.msra.mxu0 %v812
    %831 = vmatprep.subr.mxu0 0.0
    %832 = vmatpush1.msra.mxu0 %v811
    %833 = vmatprep.subr.mxu0 0.0
    %834 = vmatpush1.msra.mxu0 %v810
    %835 = vmatprep.subr.mxu0 0.0
    %836 = vmatpush1.msra.mxu0 %v809
    %837 = vmatprep.subr.mxu0 0.0
    %838 = vmatpush1.msra.mxu0 %v808
    %839 = vmatprep.subr.mxu0 0.0
    %840 = vmatpush1.msra.mxu0 %v807
    %841 = vmatprep.subr.mxu0 0.0
    %842 = vmatpush1.msra.mxu0 %v806
    %843 = vmatprep.subr.mxu0 0.0
    %844 = vmatpush1.msra.mxu0 %v805
    %845 = vmatprep.subr.mxu0 0.0
    %846 = vmatpush1.msra.mxu0 %v804
    %847 = vmatprep.subr.mxu0 0.0
    %848 = vmatpush1.msra.mxu0 %v803
    %849 = vmatprep.subr.mxu0 0.0
    %850 = vmatpush1.msra.mxu0 %v802
    %851 = vmatprep.subr.mxu0 0.0
    %852 = vmatpush1.msra.mxu0 %v801
    %853 = vmatprep.subr.mxu0 0.0
    %854 = vmatpush1.msra.mxu0 %v800
    %855 = vmatprep.subr.mxu0 0.0
    %856 = vmatpush2.msra.mxu0 0.0
    %857 = vmatprep.subr.mxu0 0.0
    %858 = vmatpush2.msra.mxu0 0.0
    %859 = vmatprep.subr.mxu0 0.0
    %860 = vmatpush2.msra.mxu0 0.0
    %861 = vmatprep.subr.mxu0 0.0
    %862 = vmatpush2.msra.mxu0 0.0
    %863 = vmatprep.subr.mxu0 0.0
    %864 = vmatpush2.msra.mxu0 0.0
    %865 = vmatprep.subr.mxu0 0.0
    %866 = vmatpush2.msra.mxu0 0.0
    %867 = vmatprep.subr.mxu0 0.0
    %868 = vmatpush2.msra.mxu0 0.0
    %869 = vmatprep.subr.mxu0 0.0
    %870 = vmatpush2.msra.mxu0 0.0
    %871 = vmatprep.subr.mxu0 0.0
    %872 = vmatpush2.msra.mxu0 0.0
    %873 = vmatprep.subr.mxu0 0.0
    %874 = vmatpush2.msra.mxu0 0.0
    %875 = vmatprep.subr.mxu0 0.0
    %876 = vmatpush2.msra.mxu0 0.0
    %877 = vmatprep.subr.mxu0 0.0
    %878 = vmatpush2.msra.mxu0 0.0
    %879 = vmatprep.subr.mxu0 0.0
    %880 = vmatpush2.msra.mxu0 0.0
    %881 = vmatprep.subr.mxu0 0.0
    %882 = vmatpush2.msra.mxu0 0.0
    %883 = vmatprep.subr.mxu0 0.0
    %884 = vmatpush2.msra.mxu0 0.0
    %885 = vmatprep.subr.mxu0 0.0
    %886 = vmatpush2.msra.mxu0 0.0
    %887 = vmatprep.mubr.f32.mxu0 0.0
    %888 = vmatmul.mubr.f32.gmra.mxu0 %v799
    %v889 = vpop.f32.mrf.mxu0
    %v890 = vadd.f32 %v821, %v889
    %v891 = vpop.f32.mrf.mxu0
    %892 = vdwg.mxu0
    %v893 = vld [vmem:[%s11] sm:$0xff]
    %v894 = vld [vmem:[%s11 + $0x8] sm:$0xff]
    %v895 = vld [vmem:[%s11 + $0x10] sm:$0xff]
    %v896 = vld [vmem:[%s11 + $0x18] sm:$0xff]
    %v897 = vld [vmem:[%s11 + $0x20] sm:$0xff]
    %v898 = vld [vmem:[%s11 + $0x28] sm:$0xff]
    %v899 = vld [vmem:[%s11 + $0x30] sm:$0xff]
    %v900 = vld [vmem:[%s11 + $0x38] sm:$0xff]
    %v901 = vld [vmem:[%s11 + $0x40] sm:$0xff]
    %v902 = vld [vmem:[%s11 + $0x48] sm:$0xff]
    %v903 = vld [vmem:[%s11 + $0x50] sm:$0xff]
    %v904 = vld [vmem:[%s11 + $0x58] sm:$0xff]
    %v905 = vld [vmem:[%s11 + $0x60] sm:$0xff]
    %v906 = vld [vmem:[%s11 + $0x68] sm:$0xff]
    %v907 = vld [vmem:[%s11 + $0x70] sm:$0xff]
    %v908 = vld [vmem:[%s11 + $0x78] sm:$0xff]
    %v909 = vld [vmem:[%s12] sm:$0x1]
    %v911 = vlaneseq
    %v912 = vshrl.u32 %v911, 7
    %v913 = vsub.s32 0, %v912
    %v914 = vrot.slane %v909, %v913
    %916 = vmatprep.subr.mxu0 0.0
    %917 = vmatpush1.msra.mxu0 %v908
    %918 = vmatprep.subr.mxu0 0.0
    %919 = vmatpush1.msra.mxu0 %v907
    %920 = vmatprep.subr.mxu0 0.0
    %921 = vmatpush1.msra.mxu0 %v906
    %922 = vmatprep.subr.mxu0 0.0
    %923 = vmatpush1.msra.mxu0 %v905
    %924 = vmatprep.subr.mxu0 0.0
    %925 = vmatpush1.msra.mxu0 %v904
    %926 = vmatprep.subr.mxu0 0.0
    %927 = vmatpush1.msra.mxu0 %v903
    %928 = vmatprep.subr.mxu0 0.0
    %929 = vmatpush1.msra.mxu0 %v902
    %930 = vmatprep.subr.mxu0 0.0
    %931 = vmatpush1.msra.mxu0 %v901
    %932 = vmatprep.subr.mxu0 0.0
    %933 = vmatpush1.msra.mxu0 %v900
    %934 = vmatprep.subr.mxu0 0.0
    %935 = vmatpush1.msra.mxu0 %v899
    %936 = vmatprep.subr.mxu0 0.0
    %937 = vmatpush1.msra.mxu0 %v898
    %938 = vmatprep.subr.mxu0 0.0
    %939 = vmatpush1.msra.mxu0 %v897
    %940 = vmatprep.subr.mxu0 0.0
    %941 = vmatpush1.msra.mxu0 %v896
    %942 = vmatprep.subr.mxu0 0.0
    %943 = vmatpush1.msra.mxu0 %v895
    %944 = vmatprep.subr.mxu0 0.0
    %945 = vmatpush1.msra.mxu0 %v894
    %946 = vmatprep.subr.mxu0 0.0
    %947 = vmatpush1.msra.mxu0 %v893
    %948 = vmatprep.subr.mxu0 0.0
    %949 = vmatpush2.msra.mxu0 0.0
    %950 = vmatprep.subr.mxu0 0.0
    %951 = vmatpush2.msra.mxu0 0.0
    %952 = vmatprep.subr.mxu0 0.0
    %953 = vmatpush2.msra.mxu0 0.0
    %954 = vmatprep.subr.mxu0 0.0
    %955 = vmatpush2.msra.mxu0 0.0
    %956 = vmatprep.subr.mxu0 0.0
    %957 = vmatpush2.msra.mxu0 0.0
    %958 = vmatprep.subr.mxu0 0.0
    %959 = vmatpush2.msra.mxu0 0.0
    %960 = vmatprep.subr.mxu0 0.0
    %961 = vmatpush2.msra.mxu0 0.0
    %962 = vmatprep.subr.mxu0 0.0
    %963 = vmatpush2.msra.mxu0 0.0
    %964 = vmatprep.subr.mxu0 0.0
    %965 = vmatpush2.msra.mxu0 0.0
    %966 = vmatprep.subr.mxu0 0.0
    %967 = vmatpush2.msra.mxu0 0.0
    %968 = vmatprep.subr.mxu0 0.0
    %969 = vmatpush2.msra.mxu0 0.0
    %970 = vmatprep.subr.mxu0 0.0
    %971 = vmatpush2.msra.mxu0 0.0
    %972 = vmatprep.subr.mxu0 0.0
    %973 = vmatpush2.msra.mxu0 0.0
    %974 = vmatprep.subr.mxu0 0.0
    %975 = vmatpush2.msra.mxu0 0.0
    %976 = vmatprep.subr.mxu0 0.0
    %977 = vmatpush2.msra.mxu0 0.0
    %978 = vmatprep.subr.mxu0 0.0
    %979 = vmatpush2.msra.mxu0 0.0
    %980 = vmatprep.mubr.f32.mxu0 0.0
    %981 = vmatmul.mubr.f32.gmra.mxu0 %v890
    %v982 = vpop.f32.mrf.mxu0
    %v983 = vadd.f32 %v914, %v982
    %v984 = vpop.f32.mrf.mxu0
    %985 = vdwg.mxu0
    %v986 = vmax.f32 %v983, 0.0
    %v987 = vld [vmem:[%s13] sm:$0xff]
    %v988 = vld [vmem:[%s13 + $0x8] sm:$0xff]
    %v989 = vld [vmem:[%s13 + $0x10] sm:$0xff]
    %v990 = vld [vmem:[%s13 + $0x18] sm:$0xff]
    %v991 = vld [vmem:[%s13 + $0x20] sm:$0xff]
    %v992 = vld [vmem:[%s13 + $0x28] sm:$0xff]
    %v993 = vld [vmem:[%s13 + $0x30] sm:$0xff]
    %v994 = vld [vmem:[%s13 + $0x38] sm:$0xff]
    %v995 = vld [vmem:[%s13 + $0x40] sm:$0xff]
    %v996 = vld [vmem:[%s13 + $0x48] sm:$0xff]
    %v997 = vld [vmem:[%s13 + $0x50] sm:$0xff]
    %v998 = vld [vmem:[%s13 + $0x58] sm:$0xff]
    %v999 = vld [vmem:[%s13 + $0x60] sm:$0xff]
    %v1000 = vld [vmem:[%s13 + $0x68] sm:$0xff]
    %v1001 = vld [vmem:[%s13 + $0x70] sm:$0xff]
    %v1002 = vld [vmem:[%s13 + $0x78] sm:$0xff]
    %v1003 = vld [vmem:[%s14] sm:$0x1]
    %v1005 = vlaneseq
    %v1006 = vshrl.u32 %v1005, 7
    %v1007 = vsub.s32 0, %v1006
    %v1008 = vrot.slane %v1003, %v1007
    %1010 = vmatprep.subr.mxu0 0.0
    %1011 = vmatpush1.msra.mxu0 %v1002
    %1012 = vmatprep.subr.mxu0 0.0
    %1013 = vmatpush1.msra.mxu0 %v1001
    %1014 = vmatprep.subr.mxu0 0.0
    %1015 = vmatpush1.msra.mxu0 %v1000
    %1016 = vmatprep.subr.mxu0 0.0
    %1017 = vmatpush1.msra.mxu0 %v999
    %1018 = vmatprep.subr.mxu0 0.0
    %1019 = vmatpush1.msra.mxu0 %v998
    %1020 = vmatprep.subr.mxu0 0.0
    %1021 = vmatpush1.msra.mxu0 %v997
    %1022 = vmatprep.subr.mxu0 0.0
    %1023 = vmatpush1.msra.mxu0 %v996
    %1024 = vmatprep.subr.mxu0 0.0
    %1025 = vmatpush1.msra.mxu0 %v995
    %1026 = vmatprep.subr.mxu0 0.0
    %1027 = vmatpush1.msra.mxu0 %v994
    %1028 = vmatprep.subr.mxu0 0.0
    %1029 = vmatpush1.msra.mxu0 %v993
    %1030 = vmatprep.subr.mxu0 0.0
    %1031 = vmatpush1.msra.mxu0 %v992
    %1032 = vmatprep.subr.mxu0 0.0
    %1033 = vmatpush1.msra.mxu0 %v991
    %1034 = vmatprep.subr.mxu0 0.0
    %1035 = vmatpush1.msra.mxu0 %v990
    %1036 = vmatprep.subr.mxu0 0.0
    %1037 = vmatpush1.msra.mxu0 %v989
    %1038 = vmatprep.subr.mxu0 0.0
    %1039 = vmatpush1.msra.mxu0 %v988
    %1040 = vmatprep.subr.mxu0 0.0
    %1041 = vmatpush1.msra.mxu0 %v987
    %1042 = vmatprep.subr.mxu0 0.0
    %1043 = vmatpush2.msra.mxu0 0.0
    %1044 = vmatprep.subr.mxu0 0.0
    %1045 = vmatpush2.msra.mxu0 0.0
    %1046 = vmatprep.subr.mxu0 0.0
    %1047 = vmatpush2.msra.mxu0 0.0
    %1048 = vmatprep.subr.mxu0 0.0
    %1049 = vmatpush2.msra.mxu0 0.0
    %1050 = vmatprep.subr.mxu0 0.0
    %1051 = vmatpush2.msra.mxu0 0.0
    %1052 = vmatprep.subr.mxu0 0.0
    %1053 = vmatpush2.msra.mxu0 0.0
    %1054 = vmatprep.subr.mxu0 0.0
    %1055 = vmatpush2.msra.mxu0 0.0
    %1056 = vmatprep.subr.mxu0 0.0
    %1057 = vmatpush2.msra.mxu0 0.0
    %1058 = vmatprep.subr.mxu0 0.0
    %1059 = vmatpush2.msra.mxu0 0.0
    %1060 = vmatprep.subr.mxu0 0.0
    %1061 = vmatpush2.msra.mxu0 0.0
    %1062 = vmatprep.subr.mxu0 0.0
    %1063 = vmatpush2.msra.mxu0 0.0
    %1064 = vmatprep.subr.mxu0 0.0
    %1065 = vmatpush2.msra.mxu0 0.0
    %1066 = vmatprep.subr.mxu0 0.0
    %1067 = vmatpush2.msra.mxu0 0.0
    %1068 = vmatprep.subr.mxu0 0.0
    %1069 = vmatpush2.msra.mxu0 0.0
    %1070 = vmatprep.subr.mxu0 0.0
    %1071 = vmatpush2.msra.mxu0 0.0
    %1072 = vmatprep.subr.mxu0 0.0
    %1073 = vmatpush2.msra.mxu0 0.0
    %1074 = vmatprep.mubr.f32.mxu0 0.0
    %1075 = vmatmul.mubr.f32.gmra.mxu0 %v986
    %v1076 = vpop.f32.mrf.mxu0
    %v1077 = vadd.f32 %v1008, %v1076
    %v1078 = vpop.f32.mrf.mxu0
    %1079 = vdwg.mxu0
    %v1080 = vmax.f32 %v1077, 0.0
    %v1081 = vld [vmem:[%s15] sm:$0xff]
    %v1082 = vld [vmem:[%s15 + $0x8] sm:$0xff]
    %v1083 = vld [vmem:[%s15 + $0x10] sm:$0xff]
    %v1084 = vld [vmem:[%s15 + $0x18] sm:$0xff]
    %v1085 = vld [vmem:[%s15 + $0x20] sm:$0xff]
    %v1086 = vld [vmem:[%s15 + $0x28] sm:$0xff]
    %v1087 = vld [vmem:[%s15 + $0x30] sm:$0xff]
    %v1088 = vld [vmem:[%s15 + $0x38] sm:$0xff]
    %v1089 = vld [vmem:[%s15 + $0x40] sm:$0xff]
    %v1090 = vld [vmem:[%s15 + $0x48] sm:$0xff]
    %v1091 = vld [vmem:[%s15 + $0x50] sm:$0xff]
    %v1092 = vld [vmem:[%s15 + $0x58] sm:$0xff]
    %v1093 = vld [vmem:[%s15 + $0x60] sm:$0xff]
    %v1094 = vld [vmem:[%s15 + $0x68] sm:$0xff]
    %v1095 = vld [vmem:[%s15 + $0x70] sm:$0xff]
    %v1096 = vld [vmem:[%s15 + $0x78] sm:$0xff]
    %v1097 = vld [vmem:[%s16] sm:$0x1]
    %v1099 = vlaneseq
    %v1100 = vshrl.u32 %v1099, 7
    %v1101 = vsub.s32 0, %v1100
    %v1102 = vrot.slane %v1097, %v1101
    %1104 = vmatprep.subr.mxu0 0.0
    %1105 = vmatpush1.msra.mxu0 %v1096
    %1106 = vmatprep.subr.mxu0 0.0
    %1107 = vmatpush1.msra.mxu0 %v1095
    %1108 = vmatprep.subr.mxu0 0.0
    %1109 = vmatpush1.msra.mxu0 %v1094
    %1110 = vmatprep.subr.mxu0 0.0
    %1111 = vmatpush1.msra.mxu0 %v1093
    %1112 = vmatprep.subr.mxu0 0.0
    %1113 = vmatpush1.msra.mxu0 %v1092
    %1114 = vmatprep.subr.mxu0 0.0
    %1115 = vmatpush1.msra.mxu0 %v1091
    %1116 = vmatprep.subr.mxu0 0.0
    %1117 = vmatpush1.msra.mxu0 %v1090
    %1118 = vmatprep.subr.mxu0 0.0
    %1119 = vmatpush1.msra.mxu0 %v1089
    %1120 = vmatprep.subr.mxu0 0.0
    %1121 = vmatpush1.msra.mxu0 %v1088
    %1122 = vmatprep.subr.mxu0 0.0
    %1123 = vmatpush1.msra.mxu0 %v1087
    %1124 = vmatprep.subr.mxu0 0.0
    %1125 = vmatpush1.msra.mxu0 %v1086
    %1126 = vmatprep.subr.mxu0 0.0
    %1127 = vmatpush1.msra.mxu0 %v1085
    %1128 = vmatprep.subr.mxu0 0.0
    %1129 = vmatpush1.msra.mxu0 %v1084
    %1130 = vmatprep.subr.mxu0 0.0
    %1131 = vmatpush1.msra.mxu0 %v1083
    %1132 = vmatprep.subr.mxu0 0.0
    %1133 = vmatpush1.msra.mxu0 %v1082
    %1134 = vmatprep.subr.mxu0 0.0
    %1135 = vmatpush1.msra.mxu0 %v1081
    %1136 = vmatprep.subr.mxu0 0.0
    %1137 = vmatpush2.msra.mxu0 0.0
    %1138 = vmatprep.subr.mxu0 0.0
    %1139 = vmatpush2.msra.mxu0 0.0
    %1140 = vmatprep.subr.mxu0 0.0
    %1141 = vmatpush2.msra.mxu0 0.0
    %1142 = vmatprep.subr.mxu0 0.0
    %1143 = vmatpush2.msra.mxu0 0.0
    %1144 = vmatprep.subr.mxu0 0.0
    %1145 = vmatpush2.msra.mxu0 0.0
    %1146 = vmatprep.subr.mxu0 0.0
    %1147 = vmatpush2.msra.mxu0 0.0
    %1148 = vmatprep.subr.mxu0 0.0
    %1149 = vmatpush2.msra.mxu0 0.0
    %1150 = vmatprep.subr.mxu0 0.0
    %1151 = vmatpush2.msra.mxu0 0.0
    %1152 = vmatprep.subr.mxu0 0.0
    %1153 = vmatpush2.msra.mxu0 0.0
    %1154 = vmatprep.subr.mxu0 0.0
    %1155 = vmatpush2.msra.mxu0 0.0
    %1156 = vmatprep.subr.mxu0 0.0
    %1157 = vmatpush2.msra.mxu0 0.0
    %1158 = vmatprep.subr.mxu0 0.0
    %1159 = vmatpush2.msra.mxu0 0.0
    %1160 = vmatprep.subr.mxu0 0.0
    %1161 = vmatpush2.msra.mxu0 0.0
    %1162 = vmatprep.subr.mxu0 0.0
    %1163 = vmatpush2.msra.mxu0 0.0
    %1164 = vmatprep.subr.mxu0 0.0
    %1165 = vmatpush2.msra.mxu0 0.0
    %1166 = vmatprep.subr.mxu0 0.0
    %1167 = vmatpush2.msra.mxu0 0.0
    %1168 = vmatprep.mubr.f32.mxu0 0.0
    %1169 = vmatmul.mubr.f32.gmra.mxu0 %v1080
    %v1170 = vpop.f32.mrf.mxu0
    %v1171 = vadd.f32 %v1102, %v1170
    %v1172 = vpop.f32.mrf.mxu0
    %1173 = vdwg.mxu0
    %v1174 = vmax.f32 %v1171, 0.0
    %v1175 = vld [vmem:[%s17] sm:$0xff]
    %v1176 = vld [vmem:[%s17 + $0x8] sm:$0xff]
    %v1177 = vld [vmem:[%s17 + $0x10] sm:$0xff]
    %v1178 = vld [vmem:[%s17 + $0x18] sm:$0xff]
    %v1179 = vld [vmem:[%s17 + $0x20] sm:$0xff]
    %v1180 = vld [vmem:[%s17 + $0x28] sm:$0xff]
    %v1181 = vld [vmem:[%s17 + $0x30] sm:$0xff]
    %v1182 = vld [vmem:[%s17 + $0x38] sm:$0xff]
    %v1183 = vld [vmem:[%s17 + $0x40] sm:$0xff]
    %v1184 = vld [vmem:[%s17 + $0x48] sm:$0xff]
    %v1185 = vld [vmem:[%s17 + $0x50] sm:$0xff]
    %v1186 = vld [vmem:[%s17 + $0x58] sm:$0xff]
    %v1187 = vld [vmem:[%s17 + $0x60] sm:$0xff]
    %v1188 = vld [vmem:[%s17 + $0x68] sm:$0xff]
    %v1189 = vld [vmem:[%s17 + $0x70] sm:$0xff]
    %v1190 = vld [vmem:[%s17 + $0x78] sm:$0xff]
    %v1191 = vld [vmem:[%s17 + $0x80] sm:$0xff]
    %v1192 = vld [vmem:[%s17 + $0x88] sm:$0xff]
    %v1193 = vld [vmem:[%s17 + $0x90] sm:$0xff]
    %v1194 = vld [vmem:[%s17 + $0x98] sm:$0xff]
    %v1195 = vld [vmem:[%s17 + $0xa0] sm:$0xff]
    %v1196 = vld [vmem:[%s17 + $0xa8] sm:$0xff]
    %v1197 = vld [vmem:[%s17 + $0xb0] sm:$0xff]
    %v1198 = vld [vmem:[%s17 + $0xb8] sm:$0xff]
    %v1199 = vld [vmem:[%s17 + $0xc0] sm:$0xff]
    %v1200 = vld [vmem:[%s17 + $0xc8] sm:$0xff]
    %v1201 = vld [vmem:[%s17 + $0xd0] sm:$0xff]
    %v1202 = vld [vmem:[%s17 + $0xd8] sm:$0xff]
    %v1203 = vld [vmem:[%s17 + $0xe0] sm:$0xff]
    %v1204 = vld [vmem:[%s17 + $0xe8] sm:$0xff]
    %v1205 = vld [vmem:[%s17 + $0xf0] sm:$0xff]
    %v1206 = vld [vmem:[%s17 + $0xf8] sm:$0xff]
    %v1207 = vld [vmem:[%s17 + $0x100] sm:$0xff]
    %v1208 = vld [vmem:[%s17 + $0x108] sm:$0xff]
    %v1209 = vld [vmem:[%s17 + $0x110] sm:$0xff]
    %v1210 = vld [vmem:[%s17 + $0x118] sm:$0xff]
    %v1211 = vld [vmem:[%s17 + $0x120] sm:$0xff]
    %v1212 = vld [vmem:[%s17 + $0x128] sm:$0xff]
    %v1213 = vld [vmem:[%s17 + $0x130] sm:$0xff]
    %v1214 = vld [vmem:[%s17 + $0x138] sm:$0xff]
    %v1215 = vld [vmem:[%s17 + $0x140] sm:$0xff]
    %v1216 = vld [vmem:[%s17 + $0x148] sm:$0xff]
    %v1217 = vld [vmem:[%s17 + $0x150] sm:$0xff]
    %v1218 = vld [vmem:[%s17 + $0x158] sm:$0xff]
    %v1219 = vld [vmem:[%s17 + $0x160] sm:$0xff]
    %v1220 = vld [vmem:[%s17 + $0x168] sm:$0xff]
    %v1221 = vld [vmem:[%s17 + $0x170] sm:$0xff]
    %v1222 = vld [vmem:[%s17 + $0x178] sm:$0xff]
    %v1223 = vld [vmem:[%s17 + $0x180] sm:$0xff]
    %v1224 = vld [vmem:[%s17 + $0x188] sm:$0xff]
    %v1225 = vld [vmem:[%s17 + $0x190] sm:$0xff]
    %v1226 = vld [vmem:[%s17 + $0x198] sm:$0xff]
    %v1227 = vld [vmem:[%s17 + $0x1a0] sm:$0xff]
    %v1228 = vld [vmem:[%s17 + $0x1a8] sm:$0xff]
    %v1229 = vld [vmem:[%s17 + $0x1b0] sm:$0xff]
    %v1230 = vld [vmem:[%s17 + $0x1b8] sm:$0xff]
    %v1231 = vld [vmem:[%s17 + $0x1c0] sm:$0xff]
    %v1232 = vld [vmem:[%s17 + $0x1c8] sm:$0xff]
    %v1233 = vld [vmem:[%s17 + $0x1d0] sm:$0xff]
    %v1234 = vld [vmem:[%s17 + $0x1d8] sm:$0xff]
    %v1235 = vld [vmem:[%s17 + $0x1e0] sm:$0xff]
    %v1236 = vld [vmem:[%s17 + $0x1e8] sm:$0xff]
    %v1237 = vld [vmem:[%s17 + $0x1f0] sm:$0xff]
    %v1238 = vld [vmem:[%s17 + $0x1f8] sm:$0xff]
    %v1239 = vld [vmem:[%s17 + $0x200] sm:$0xff]
    %v1240 = vld [vmem:[%s17 + $0x208] sm:$0xff]
    %v1241 = vld [vmem:[%s17 + $0x210] sm:$0xff]
    %v1242 = vld [vmem:[%s17 + $0x218] sm:$0xff]
    %v1243 = vld [vmem:[%s17 + $0x220] sm:$0xff]
    %v1244 = vld [vmem:[%s17 + $0x228] sm:$0xff]
    %v1245 = vld [vmem:[%s17 + $0x230] sm:$0xff]
    %v1246 = vld [vmem:[%s17 + $0x238] sm:$0xff]
    %v1247 = vld [vmem:[%s17 + $0x240] sm:$0xff]
    %v1248 = vld [vmem:[%s17 + $0x248] sm:$0xff]
    %v1249 = vld [vmem:[%s17 + $0x250] sm:$0xff]
    %v1250 = vld [vmem:[%s17 + $0x258] sm:$0xff]
    %v1251 = vld [vmem:[%s17 + $0x260] sm:$0xff]
    %v1252 = vld [vmem:[%s17 + $0x268] sm:$0xff]
    %v1253 = vld [vmem:[%s17 + $0x270] sm:$0xff]
    %v1254 = vld [vmem:[%s17 + $0x278] sm:$0xff]
    %v1255 = vld [vmem:[%s17 + $0x280] sm:$0xff]
    %v1256 = vld [vmem:[%s17 + $0x288] sm:$0xff]
    %v1257 = vld [vmem:[%s17 + $0x290] sm:$0xff]
    %v1258 = vld [vmem:[%s17 + $0x298] sm:$0xff]
    %v1259 = vld [vmem:[%s17 + $0x2a0] sm:$0xff]
    %v1260 = vld [vmem:[%s17 + $0x2a8] sm:$0xff]
    %v1261 = vld [vmem:[%s17 + $0x2b0] sm:$0xff]
    %v1262 = vld [vmem:[%s17 + $0x2b8] sm:$0xff]
    %v1263 = vld [vmem:[%s17 + $0x2c0] sm:$0xff]
    %v1264 = vld [vmem:[%s17 + $0x2c8] sm:$0xff]
    %v1265 = vld [vmem:[%s17 + $0x2d0] sm:$0xff]
    %v1266 = vld [vmem:[%s17 + $0x2d8] sm:$0xff]
    %v1267 = vld [vmem:[%s17 + $0x2e0] sm:$0xff]
    %v1268 = vld [vmem:[%s17 + $0x2e8] sm:$0xff]
    %v1269 = vld [vmem:[%s17 + $0x2f0] sm:$0xff]
    %v1270 = vld [vmem:[%s17 + $0x2f8] sm:$0xff]
    %v1271 = vld [vmem:[%s17 + $0x300] sm:$0xff]
    %v1272 = vld [vmem:[%s17 + $0x308] sm:$0xff]
    %v1273 = vld [vmem:[%s17 + $0x310] sm:$0xff]
    %v1274 = vld [vmem:[%s17 + $0x318] sm:$0xff]
    %v1275 = vld [vmem:[%s17 + $0x320] sm:$0xff]
    %v1276 = vld [vmem:[%s17 + $0x328] sm:$0xff]
    %v1277 = vld [vmem:[%s17 + $0x330] sm:$0xff]
    %v1278 = vld [vmem:[%s17 + $0x338] sm:$0xff]
    %v1279 = vld [vmem:[%s17 + $0x340] sm:$0xff]
    %v1280 = vld [vmem:[%s17 + $0x348] sm:$0xff]
    %v1281 = vld [vmem:[%s17 + $0x350] sm:$0xff]
    %v1282 = vld [vmem:[%s17 + $0x358] sm:$0xff]
    %v1283 = vld [vmem:[%s17 + $0x360] sm:$0xff]
    %v1284 = vld [vmem:[%s17 + $0x368] sm:$0xff]
    %v1285 = vld [vmem:[%s17 + $0x370] sm:$0xff]
    %v1286 = vld [vmem:[%s17 + $0x378] sm:$0xff]
    %v1287 = vld [vmem:[%s18] sm:$0x7f]
    %v1289 = vlaneseq
    %v1290 = vshrl.u32 %v1289, 7
    %v1291 = vsub.s32 0, %v1290
    %v1292 = vrot.slane %v1287, %v1291
    %v1293 = vlaneseq
    %v1294 = vshrl.u32 %v1293, 7
    %v1295 = vsub.s32 1, %v1294
    %v1296 = vrot.slane %v1287, %v1295
    %v1297 = vlaneseq
    %v1298 = vshrl.u32 %v1297, 7
    %v1299 = vsub.s32 2, %v1298
    %v1300 = vrot.slane %v1287, %v1299
    %v1301 = vlaneseq
    %v1302 = vshrl.u32 %v1301, 7
    %v1303 = vsub.s32 3, %v1302
    %v1304 = vrot.slane %v1287, %v1303
    %v1305 = vlaneseq
    %v1306 = vshrl.u32 %v1305, 7
    %v1307 = vsub.s32 4, %v1306
    %v1308 = vrot.slane %v1287, %v1307
    %v1309 = vlaneseq
    %v1310 = vshrl.u32 %v1309, 7
    %v1311 = vsub.s32 5, %v1310
    %v1312 = vrot.slane %v1287, %v1311
    %v1313 = vlaneseq
    %v1314 = vshrl.u32 %v1313, 7
    %v1315 = vsub.s32 6, %v1314
    %v1316 = vrot.slane %v1287, %v1315
    %1324 = vmatprep.subr.mxu0 %v1281
    %1325 = vmatpush1.msra.mxu0 %v1280
    %1326 = vmatprep.subr.mxu0 %v1274
    %1327 = vmatpush1.msra.mxu0 %v1273
    %1328 = vmatprep.subr.mxu0 %v1267
    %1329 = vmatpush1.msra.mxu0 %v1266
    %1330 = vmatprep.subr.mxu0 %v1260
    %1331 = vmatpush1.msra.mxu0 %v1259
    %1332 = vmatprep.subr.mxu0 %v1253
    %1333 = vmatpush1.msra.mxu0 %v1252
    %1334 = vmatprep.subr.mxu0 %v1246
    %1335 = vmatpush1.msra.mxu0 %v1245
    %1336 = vmatprep.subr.mxu0 %v1239
    %1337 = vmatpush1.msra.mxu0 %v1238
    %1338 = vmatprep.subr.mxu0 %v1232
    %1339 = vmatpush1.msra.mxu0 %v1231
    %1340 = vmatprep.subr.mxu0 %v1225
    %1341 = vmatpush1.msra.mxu0 %v1224
    %1342 = vmatprep.subr.mxu0 %v1218
    %1343 = vmatpush1.msra.mxu0 %v1217
    %1344 = vmatprep.subr.mxu0 %v1211
    %1345 = vmatpush1.msra.mxu0 %v1210
    %1346 = vmatprep.subr.mxu0 %v1204
    %1347 = vmatpush1.msra.mxu0 %v1203
    %1348 = vmatprep.subr.mxu0 %v1197
    %1349 = vmatpush1.msra.mxu0 %v1196
    %1350 = vmatprep.subr.mxu0 %v1190
    %1351 = vmatpush1.msra.mxu0 %v1189
    %1352 = vmatprep.subr.mxu0 %v1183
    %1353 = vmatpush1.msra.mxu0 %v1182
    %1354 = vmatprep.subr.mxu0 %v1176
    %1355 = vmatpush1.msra.mxu0 %v1175
    %1356 = vmatprep.subr.mxu0 0.0
    %1357 = vmatpush2.msra.mxu0 0.0
    %1358 = vmatprep.subr.mxu0 0.0
    %1359 = vmatpush2.msra.mxu0 0.0
    %1360 = vmatprep.subr.mxu0 0.0
    %1361 = vmatpush2.msra.mxu0 0.0
    %1362 = vmatprep.subr.mxu0 0.0
    %1363 = vmatpush2.msra.mxu0 0.0
    %1364 = vmatprep.subr.mxu0 0.0
    %1365 = vmatpush2.msra.mxu0 0.0
    %1366 = vmatprep.subr.mxu0 0.0
    %1367 = vmatpush2.msra.mxu0 0.0
    %1368 = vmatprep.subr.mxu0 0.0
    %1369 = vmatpush2.msra.mxu0 0.0
    %1370 = vmatprep.subr.mxu0 0.0
    %1371 = vmatpush2.msra.mxu0 0.0
    %1372 = vmatprep.subr.mxu0 0.0
    %1373 = vmatpush2.msra.mxu0 0.0
    %1374 = vmatprep.subr.mxu0 0.0
    %1375 = vmatpush2.msra.mxu0 0.0
    %1376 = vmatprep.subr.mxu0 0.0
    %1377 = vmatpush2.msra.mxu0 0.0
    %1378 = vmatprep.subr.mxu0 0.0
    %1379 = vmatpush2.msra.mxu0 0.0
    %1380 = vmatprep.subr.mxu0 0.0
    %1381 = vmatpush2.msra.mxu0 0.0
    %1382 = vmatprep.subr.mxu0 0.0
    %1383 = vmatpush2.msra.mxu0 0.0
    %1384 = vmatprep.subr.mxu0 0.0
    %1385 = vmatpush2.msra.mxu0 0.0
    %1386 = vmatprep.subr.mxu0 0.0
    %1387 = vmatpush2.msra.mxu0 0.0
    %1388 = vmatprep.mubr.f32.mxu0 0.0
    %1389 = vmatmul.mubr.f32.gmra.mxu0 %v1174
    %v1390 = vpop.f32.mrf.mxu0
    %v1391 = vadd.f32 %v1292, %v1390
    %v1392 = vpop.f32.mrf.mxu0
    %v1393 = vadd.f32 %v1296, %v1392
    %1394 = vdwg.mxu0
    %1395 = vmatprep.subr.mxu0 %v1283
    %1396 = vmatpush1.msra.mxu0 %v1282
    %1397 = vmatprep.subr.mxu0 %v1276
    %1398 = vmatpush1.msra.mxu0 %v1275
    %1399 = vmatprep.subr.mxu0 %v1269
    %1400 = vmatpush1.msra.mxu0 %v1268
    %1401 = vmatprep.subr.mxu0 %v1262
    %1402 = vmatpush1.msra.mxu0 %v1261
    %1403 = vmatprep.subr.mxu0 %v1255
    %1404 = vmatpush1.msra.mxu0 %v1254
    %1405 = vmatprep.subr.mxu0 %v1248
    %1406 = vmatpush1.msra.mxu0 %v1247
    %1407 = vmatprep.subr.mxu0 %v1241
    %1408 = vmatpush1.msra.mxu0 %v1240
    %1409 = vmatprep.subr.mxu0 %v1234
    %1410 = vmatpush1.msra.mxu0 %v1233
    %1411 = vmatprep.subr.mxu0 %v1227
    %1412 = vmatpush1.msra.mxu0 %v1226
    %1413 = vmatprep.subr.mxu0 %v1220
    %1414 = vmatpush1.msra.mxu0 %v1219
    %1415 = vmatprep.subr.mxu0 %v1213
    %1416 = vmatpush1.msra.mxu0 %v1212
    %1417 = vmatprep.subr.mxu0 %v1206
    %1418 = vmatpush1.msra.mxu0 %v1205
    %1419 = vmatprep.subr.mxu0 %v1199
    %1420 = vmatpush1.msra.mxu0 %v1198
    %1421 = vmatprep.subr.mxu0 %v1192
    %1422 = vmatpush1.msra.mxu0 %v1191
    %1423 = vmatprep.subr.mxu0 %v1185
    %1424 = vmatpush1.msra.mxu0 %v1184
    %1425 = vmatprep.subr.mxu0 %v1178
    %1426 = vmatpush1.msra.mxu0 %v1177
    %1427 = vmatprep.subr.mxu0 0.0
    %1428 = vmatpush2.msra.mxu0 0.0
    %1429 = vmatprep.subr.mxu0 0.0
    %1430 = vmatpush2.msra.mxu0 0.0
    %1431 = vmatprep.subr.mxu0 0.0
    %1432 = vmatpush2.msra.mxu0 0.0
    %1433 = vmatprep.subr.mxu0 0.0
    %1434 = vmatpush2.msra.mxu0 0.0
    %1435 = vmatprep.subr.mxu0 0.0
    %1436 = vmatpush2.msra.mxu0 0.0
    %1437 = vmatprep.subr.mxu0 0.0
    %1438 = vmatpush2.msra.mxu0 0.0
    %1439 = vmatprep.subr.mxu0 0.0
    %1440 = vmatpush2.msra.mxu0 0.0
    %1441 = vmatprep.subr.mxu0 0.0
    %1442 = vmatpush2.msra.mxu0 0.0
    %1443 = vmatprep.subr.mxu0 0.0
    %1444 = vmatpush2.msra.mxu0 0.0
    %1445 = vmatprep.subr.mxu0 0.0
    %1446 = vmatpush2.msra.mxu0 0.0
    %1447 = vmatprep.subr.mxu0 0.0
    %1448 = vmatpush2.msra.mxu0 0.0
    %1449 = vmatprep.subr.mxu0 0.0
    %1450 = vmatpush2.msra.mxu0 0.0
    %1451 = vmatprep.subr.mxu0 0.0
    %1452 = vmatpush2.msra.mxu0 0.0
    %1453 = vmatprep.subr.mxu0 0.0
    %1454 = vmatpush2.msra.mxu0 0.0
    %1455 = vmatprep.subr.mxu0 0.0
    %1456 = vmatpush2.msra.mxu0 0.0
    %1457 = vmatprep.subr.mxu0 0.0
    %1458 = vmatpush2.msra.mxu0 0.0
    %1459 = vmatprep.mubr.f32.mxu0 0.0
    %1460 = vmatmul.mubr.f32.gmra.mxu0 %v1174
    %v1461 = vpop.f32.mrf.mxu0
    %v1462 = vadd.f32 %v1300, %v1461
    %v1463 = vpop.f32.mrf.mxu0
    %v1464 = vadd.f32 %v1304, %v1463
    %1465 = vdwg.mxu0
    %1466 = vmatprep.subr.mxu0 %v1285
    %1467 = vmatpush1.msra.mxu0 %v1284
    %1468 = vmatprep.subr.mxu0 %v1278
    %1469 = vmatpush1.msra.mxu0 %v1277
    %1470 = vmatprep.subr.mxu0 %v1271
    %1471 = vmatpush1.msra.mxu0 %v1270
    %1472 = vmatprep.subr.mxu0 %v1264
    %1473 = vmatpush1.msra.mxu0 %v1263
    %1474 = vmatprep.subr.mxu0 %v1257
    %1475 = vmatpush1.msra.mxu0 %v1256
    %1476 = vmatprep.subr.mxu0 %v1250
    %1477 = vmatpush1.msra.mxu0 %v1249
    %1478 = vmatprep.subr.mxu0 %v1243
    %1479 = vmatpush1.msra.mxu0 %v1242
    %1480 = vmatprep.subr.mxu0 %v1236
    %1481 = vmatpush1.msra.mxu0 %v1235
    %1482 = vmatprep.subr.mxu0 %v1229
    %1483 = vmatpush1.msra.mxu0 %v1228
    %1484 = vmatprep.subr.mxu0 %v1222
    %1485 = vmatpush1.msra.mxu0 %v1221
    %1486 = vmatprep.subr.mxu0 %v1215
    %1487 = vmatpush1.msra.mxu0 %v1214
    %1488 = vmatprep.subr.mxu0 %v1208
    %1489 = vmatpush1.msra.mxu0 %v1207
    %1490 = vmatprep.subr.mxu0 %v1201
    %1491 = vmatpush1.msra.mxu0 %v1200
    %1492 = vmatprep.subr.mxu0 %v1194
    %1493 = vmatpush1.msra.mxu0 %v1193
    %1494 = vmatprep.subr.mxu0 %v1187
    %1495 = vmatpush1.msra.mxu0 %v1186
    %1496 = vmatprep.subr.mxu0 %v1180
    %1497 = vmatpush1.msra.mxu0 %v1179
    %1498 = vmatprep.subr.mxu0 0.0
    %1499 = vmatpush2.msra.mxu0 0.0
    %1500 = vmatprep.subr.mxu0 0.0
    %1501 = vmatpush2.msra.mxu0 0.0
    %1502 = vmatprep.subr.mxu0 0.0
    %1503 = vmatpush2.msra.mxu0 0.0
    %1504 = vmatprep.subr.mxu0 0.0
    %1505 = vmatpush2.msra.mxu0 0.0
    %1506 = vmatprep.subr.mxu0 0.0
    %1507 = vmatpush2.msra.mxu0 0.0
    %1508 = vmatprep.subr.mxu0 0.0
    %1509 = vmatpush2.msra.mxu0 0.0
    %1510 = vmatprep.subr.mxu0 0.0
    %1511 = vmatpush2.msra.mxu0 0.0
    %1512 = vmatprep.subr.mxu0 0.0
    %1513 = vmatpush2.msra.mxu0 0.0
    %1514 = vmatprep.subr.mxu0 0.0
    %1515 = vmatpush2.msra.mxu0 0.0
    %1516 = vmatprep.subr.mxu0 0.0
    %1517 = vmatpush2.msra.mxu0 0.0
    %1518 = vmatprep.subr.mxu0 0.0
    %1519 = vmatpush2.msra.mxu0 0.0
    %1520 = vmatprep.subr.mxu0 0.0
    %1521 = vmatpush2.msra.mxu0 0.0
    %1522 = vmatprep.subr.mxu0 0.0
    %1523 = vmatpush2.msra.mxu0 0.0
    %1524 = vmatprep.subr.mxu0 0.0
    %1525 = vmatpush2.msra.mxu0 0.0
    %1526 = vmatprep.subr.mxu0 0.0
    %1527 = vmatpush2.msra.mxu0 0.0
    %1528 = vmatprep.subr.mxu0 0.0
    %1529 = vmatpush2.msra.mxu0 0.0
    %1530 = vmatprep.mubr.f32.mxu0 0.0
    %1531 = vmatmul.mubr.f32.gmra.mxu0 %v1174
    %v1532 = vpop.f32.mrf.mxu0
    %v1533 = vadd.f32 %v1308, %v1532
    %v1534 = vpop.f32.mrf.mxu0
    %v1535 = vadd.f32 %v1312, %v1534
    %1536 = vdwg.mxu0
    %1537 = vmatprep.subr.mxu0 0.0
    %1538 = vmatpush1.msra.mxu0 %v1286
    %1539 = vmatprep.subr.mxu0 0.0
    %1540 = vmatpush1.msra.mxu0 %v1279
    %1541 = vmatprep.subr.mxu0 0.0
    %1542 = vmatpush1.msra.mxu0 %v1272
    %1543 = vmatprep.subr.mxu0 0.0
    %1544 = vmatpush1.msra.mxu0 %v1265
    %1545 = vmatprep.subr.mxu0 0.0
    %1546 = vmatpush1.msra.mxu0 %v1258
    %1547 = vmatprep.subr.mxu0 0.0
    %1548 = vmatpush1.msra.mxu0 %v1251
    %1549 = vmatprep.subr.mxu0 0.0
    %1550 = vmatpush1.msra.mxu0 %v1244
    %1551 = vmatprep.subr.mxu0 0.0
    %1552 = vmatpush1.msra.mxu0 %v1237
    %1553 = vmatprep.subr.mxu0 0.0
    %1554 = vmatpush1.msra.mxu0 %v1230
    %1555 = vmatprep.subr.mxu0 0.0
    %1556 = vmatpush1.msra.mxu0 %v1223
    %1557 = vmatprep.subr.mxu0 0.0
    %1558 = vmatpush1.msra.mxu0 %v1216
    %1559 = vmatprep.subr.mxu0 0.0
    %1560 = vmatpush1.msra.mxu0 %v1209
    %1561 = vmatprep.subr.mxu0 0.0
    %1562 = vmatpush1.msra.mxu0 %v1202
    %1563 = vmatprep.subr.mxu0 0.0
    %1564 = vmatpush1.msra.mxu0 %v1195
    %1565 = vmatprep.subr.mxu0 0.0
    %1566 = vmatpush1.msra.mxu0 %v1188
    %1567 = vmatprep.subr.mxu0 0.0
    %1568 = vmatpush1.msra.mxu0 %v1181
    %1569 = vmatprep.subr.mxu0 0.0
    %1570 = vmatpush2.msra.mxu0 0.0
    %1571 = vmatprep.subr.mxu0 0.0
    %1572 = vmatpush2.msra.mxu0 0.0
    %1573 = vmatprep.subr.mxu0 0.0
    %1574 = vmatpush2.msra.mxu0 0.0
    %1575 = vmatprep.subr.mxu0 0.0
    %1576 = vmatpush2.msra.mxu0 0.0
    %1577 = vmatprep.subr.mxu0 0.0
    %1578 = vmatpush2.msra.mxu0 0.0
    %1579 = vmatprep.subr.mxu0 0.0
    %1580 = vmatpush2.msra.mxu0 0.0
    %1581 = vmatprep.subr.mxu0 0.0
    %1582 = vmatpush2.msra.mxu0 0.0
    %1583 = vmatprep.subr.mxu0 0.0
    %1584 = vmatpush2.msra.mxu0 0.0
    %1585 = vmatprep.subr.mxu0 0.0
    %1586 = vmatpush2.msra.mxu0 0.0
    %1587 = vmatprep.subr.mxu0 0.0
    %1588 = vmatpush2.msra.mxu0 0.0
    %1589 = vmatprep.subr.mxu0 0.0
    %1590 = vmatpush2.msra.mxu0 0.0
    %1591 = vmatprep.subr.mxu0 0.0
    %1592 = vmatpush2.msra.mxu0 0.0
    %1593 = vmatprep.subr.mxu0 0.0
    %1594 = vmatpush2.msra.mxu0 0.0
    %1595 = vmatprep.subr.mxu0 0.0
    %1596 = vmatpush2.msra.mxu0 0.0
    %1597 = vmatprep.subr.mxu0 0.0
    %1598 = vmatpush2.msra.mxu0 0.0
    %1599 = vmatprep.subr.mxu0 0.0
    %1600 = vmatpush2.msra.mxu0 0.0
    %1601 = vmatprep.mubr.f32.mxu0 0.0
    %1602 = vmatmul.mubr.f32.gmra.mxu0 %v1174
    %v1603 = vpop.f32.mrf.mxu0
    %v1604 = vadd.f32 %v1316, %v1603
    %v1605 = vpop.f32.mrf.mxu0
    %1606 = vdwg.mxu0
    %v1607 = vtanh.pop %v1391
    %v1608 = vtanh.pop %v1393
    %v1609 = vtanh.pop %v1462
    %v1610 = vtanh.pop %v1464
    %v1611 = vtanh.pop %v1533
    %v1612 = vtanh.pop %v1535
    %v1613 = vtanh.pop %v1604
    %1614 = vst [vmem:[#allocation11] sm:$0xff] %v1607
    %1615 = vst [vmem:[#allocation11 + $0x8] sm:$0xff] %v1608
    %1616 = vst [vmem:[#allocation11 + $0x10] sm:$0xff] %v1609
    %1617 = vst [vmem:[#allocation11 + $0x18] sm:$0xff] %v1610
    %1618 = vst [vmem:[#allocation11 + $0x20] sm:$0xff] %v1611
    %1619 = vst [vmem:[#allocation11 + $0x28] sm:$0xff] %v1612
    %1620 = vst.msk [vmem:[#allocation11 + $0x30] sm:$0xff] %vm233, %v1613
    // Predicated region
    $region98: #{tpu_custom_call.1} parent=1 // pred_check
      _
    $region99: #{tpu_custom_call.1} parent=1 // pred_check_branch
      %1622 = sbr.rel (0) target = $region101
    $region100: #{tpu_custom_call.1} parent=1 // pred_region
      %s1624 = ssub.s32 896, 896
      %1625 = vsyncadd [#allocation4], %s1624
      %s1627 = sshll.u32 [#allocation11], 4
      %s1628 = int_to_ptr.vmem [resolvable:$true] %s1627
      %1630 = dma.vmem_to_hbm [thread:$0]  %s1628, 896, %s19, [#allocation4]
    $region101: #{tpu_custom_call.1} parent=1 // pred_fallthru
      _
    // Predicated region
    $region102: #{tpu_custom_call.1} parent=1 // pred_check
      _
    $region103: #{tpu_custom_call.1} parent=1 // pred_check_branch
      %1632 = sbr.rel (0) target = $region105
    $region104: #{tpu_custom_call.1} parent=1 // pred_region
      %1633 = dma.done [#allocation4], 896
    $region105: #{tpu_custom_call.1} parent=1 // pred_fallthru
      _
    %1634 = vsyncpa [#allocation3], 1
    %1635 = vsyncpa [#allocation6], 1
    %1636 = vsyncpa [#allocation9], 1
    %1637 = vsyncpa [#allocation4], 1

</llo_original>
